<compile_context>
chip_gen: v6e
topology: v6e:2x2x1
jax: 0.10.0
libtpu: 0.0.40
codegen_flags: <defaults>
</compile_context>

<pallas_src>
import functools

import jax
import jax.numpy as jnp
from jax.experimental import pallas as pl
from jax.experimental.pallas import tpu as pltpu


def _round_up(x: int, m: int) -> int:
    return ((x + m - 1) // m) * m


def _bilinear_mlp_kernel(x_ref, we_ref, wlr_ref, wu_ref, o_ref,
                         *, n_layer: int, d_h: int, residual: bool):
    """One batch tile: embed -> n_layer fused bilinear gates -> head (lane-dense output)."""
    compute_dtype = we_ref.dtype
    # Embed: [tm, d_in] @ [d_in, d_h] -> f32, then back to bf16 for the MXU.
    h = jnp.dot(x_ref[...], we_ref[...], preferred_element_type=jnp.float32)
    h = h.astype(compute_dtype)
    for l in range(n_layer):  # static unroll; wlr_ref[l] is a static first-axis index
        # Fused gate matmul: one [tm, d_h] @ [d_h, 2*d_h] dot instead of two half-width dots.
        lr = jnp.dot(h, wlr_ref[l], preferred_element_type=jnp.float32)
        gated = lr[:, :d_h] * lr[:, d_h:]          # lane-aligned split (d_h % 128 == 0)
        if residual:
            gated = h.astype(jnp.float32) + gated
        h = gated.astype(compute_dtype)
    # Head: [tm, d_h] @ [d_h, d_out_pad] -> f32, lane-dense (128-multiple) store.
    o_ref[...] = jnp.dot(h, wu_ref[...], preferred_element_type=jnp.float32)


def prepare_params(w_e, w_blocks, w_u, *, compute_dtype=jnp.bfloat16):
    """One-time (parameter-load-time) weight preprocessing; keep the per-forward path clean.

    w_e      : [d_hidden, d_input]                 (torch Linear layout: [out, in])
    w_blocks : [n_layer, 2*d_hidden, d_hidden]     (Bilinear weight, '(s o) h' with s=2)
    w_u      : [d_output, d_hidden]
    returns  : (w_e_t [d_in, d_h], w_lr_t [L, d_h, 2*d_h], w_u_t [d_h, d_out_pad], d_out)
    """
    n_layer, two_dh, d_h = w_blocks.shape
    assert two_dh == 2 * d_h
    assert d_h % 128 == 0, "fused l/r lane split assumes d_hidden is a multiple of 128"

    w_lr = w_blocks.reshape(n_layer, 2, d_h, d_h)
    w_l_t = jnp.transpose(w_lr[:, 0], (0, 2, 1))            # [L, d_h, d_h]  (pre-transposed to [in,out])
    w_r_t = jnp.transpose(w_lr[:, 1], (0, 2, 1))            # [L, d_h, d_h]
    w_lr_t = jnp.concatenate([w_l_t, w_r_t], axis=-1).astype(compute_dtype)  # [L, d_h, 2*d_h]

    w_e_t = w_e.T.astype(compute_dtype)                     # [d_in, d_h]

    d_out = w_u.shape[0]
    d_out_pad = _round_up(d_out, 128)                       # lane-dense head / output
    w_u_t = jnp.zeros((d_h, d_out_pad), compute_dtype).at[:, :d_out].set(
        w_u.T.astype(compute_dtype))                        # [d_h, d_out_pad]
    return w_e_t, w_lr_t, w_u_t, d_out


def bilinear_mlp_forward(x, w_e_t, w_lr_t, w_u_t, d_out, *,
                         residual: bool = False, batch_tile: int = 256):
    """x: [B, ...] -> [B, d_out] float32 (x is flattened like torch .flatten(start_dim=1))."""
    B = x.shape[0]
    compute_dtype = w_e_t.dtype
    x2 = x.reshape(B, -1).astype(compute_dtype)

    d_in, d_h = w_e_t.shape
    n_layer = w_lr_t.shape[0]
    d_out_pad = w_u_t.shape[1]
    assert x2.shape[1] == d_in

    # Batch tile: multiple of 8 sublanes, capped at batch_tile (256 fills the MXU M on v6e/v7x).
    tm = min(batch_tile, _round_up(B, 8))
    b_pad = _round_up(B, tm)
    if b_pad != B:
        x2 = jnp.pad(x2, ((0, b_pad - B), (0, 0)))
    grid = (b_pad // tm,)

    kernel = functools.partial(_bilinear_mlp_kernel,
                               n_layer=n_layer, d_h=d_h, residual=residual)

    # Actual VMEM footprint (weights resident + double-buffered activation tiles + f32 temps),
    # with headroom, capped at 32 MiB (never request the whole physical VMEM).
    itemsize = jnp.dtype(compute_dtype).itemsize
    weight_bytes = (d_in * d_h + n_layer * d_h * 2 * d_h + d_h * d_out_pad) * itemsize
    act_bytes = 2 * tm * d_in * itemsize + 2 * tm * d_out_pad * 4
    temp_bytes = 4 * tm * (2 * d_h) * 4
    vmem_limit = min(32 << 20,
                     max(4 << 20, int(1.5 * (weight_bytes + act_bytes + temp_bytes)) + (2 << 20)))

    out = pl.pallas_call(
        kernel,
        out_shape=jax.ShapeDtypeStruct((b_pad, d_out_pad), jnp.float32),
        grid=grid,
        in_specs=[
            pl.BlockSpec((tm, d_in), lambda i: (i, 0)),                    # activations: tiled over batch
            pl.BlockSpec((d_in, d_h), lambda i: (0, 0)),                   # W_e^T: resident
            pl.BlockSpec((n_layer, d_h, 2 * d_h), lambda i: (0, 0, 0)),    # W_l|W_r (transposed): resident
            pl.BlockSpec((d_h, d_out_pad), lambda i: (0, 0)),              # W_u^T (padded): resident
        ],
        out_specs=pl.BlockSpec((tm, d_out_pad), lambda i: (i, 0)),
        compiler_params=pltpu.CompilerParams(
            dimension_semantics=("parallel",),
            vmem_limit_bytes=vmem_limit,
        ),
    )(x2, w_e_t, w_lr_t, w_u_t)

    return out[:B, :d_out]


def _reference_forward_bf16(x, w_e, w_blocks, w_u, residual=False):
    """Pure-JAX reference with the same bf16-input / f32-accumulate scheme as the kernel."""
    cd = jnp.bfloat16
    B = x.shape[0]
    h = jnp.dot(x.reshape(B, -1).astype(cd), w_e.T.astype(cd),
                preferred_element_type=jnp.float32).astype(cd)
    n_layer, _, d_h = w_blocks.shape
    for l in range(n_layer):
        wl = w_blocks[l, :d_h, :].astype(cd)
        wr = w_blocks[l, d_h:, :].astype(cd)
        gated = (jnp.dot(h, wl.T, preferred_element_type=jnp.float32) *
                 jnp.dot(h, wr.T, preferred_element_type=jnp.float32))
        if residual:
            gated = h.astype(jnp.float32) + gated
        h = gated.astype(cd)
    return jnp.dot(h, w_u.T.astype(cd), preferred_element_type=jnp.float32)


if __name__ == "__main__":
    # Small shapes consistent with the module's forward:
    # image-ish input [B, 1, 16, 16] -> flattened d_input = 256
    B, C, H, W = 8, 1, 16, 16
    d_input = C * H * W          # 256
    d_hidden = 256               # multiple of 128 (required by the fused lane split)
    d_output = 10
    n_layer = 3

    key = jax.random.PRNGKey(0)
    kx, ke, kb, ku = jax.random.split(key, 4)

    x = jax.random.normal(kx, (B, C, H, W), dtype=jnp.float32)
    # Deterministic parameter init (kaiming-ish scaling by 1/sqrt(fan_in)).
    w_e = jax.random.normal(ke, (d_hidden, d_input), dtype=jnp.float32) / jnp.sqrt(d_input)
    w_blocks = jax.random.normal(kb, (n_layer, 2 * d_hidden, d_hidden),
                                 dtype=jnp.float32) / jnp.sqrt(d_hidden)
    w_u = jax.random.normal(ku, (d_output, d_hidden), dtype=jnp.float32) / jnp.sqrt(d_hidden)

    # One-time weight preprocessing (done at parameter-load time, not per forward).
    w_e_t, w_lr_t, w_u_t, d_out = prepare_params(w_e, w_blocks, w_u)
    w_e_t, w_lr_t, w_u_t = jax.block_until_ready((w_e_t, w_lr_t, w_u_t))

    out = bilinear_mlp_forward(x, w_e_t, w_lr_t, w_u_t, d_out, residual=False)
    out = jax.block_until_ready(out)

    ref = _reference_forward_bf16(x, w_e, w_blocks, w_u, residual=False)
    assert out.shape == (B, d_output)
    assert jnp.allclose(out, ref, atol=1e-2, rtol=1e-2), "mismatch vs bf16-matched JAX reference"

    print("KERNEL_OK")
</pallas_src>

<mosaic_0001>
module attributes {stable_mosaic.version = 11 : i64} {
  func.func @_bilinear_mlp_kernel(%arg0: i32, %arg1: memref<8x256xbf16, #tpu.memory_space<vmem>>, %arg2: memref<256x256xbf16, #tpu.memory_space<vmem>>, %arg3: memref<3x256x512xbf16, #tpu.memory_space<vmem>>, %arg4: memref<256x128xbf16, #tpu.memory_space<vmem>>, %arg5: memref<8x128xf32, #tpu.memory_space<vmem>>) attributes {dimension_semantics = [#tpu.dimension_semantics<parallel>], iteration_bounds = array<i64: 1>, scalar_prefetch = 0 : i64, scratch_operands = 0 : i64, tpu.core_type = #tpu.core_type<tc>, window_params = [{transform_indices = @transform_0, window_bounds = array<i64: 8, 256>}, {pipeline_mode = #tpu.pipeline_mode<synchronous>, transform_indices = @transform_1, window_bounds = array<i64: 256, 256>}, {pipeline_mode = #tpu.pipeline_mode<synchronous>, transform_indices = @transform_2, window_bounds = array<i64: 3, 256, 512>}, {pipeline_mode = #tpu.pipeline_mode<synchronous>, transform_indices = @transform_3, window_bounds = array<i64: 256, 128>}, {transform_indices = @transform_4, window_bounds = array<i64: 8, 128>}]} {
    %c0 = arith.constant 0 : index
    %c0_0 = arith.constant 0 : index
    %0 = vector.load %arg1[%c0, %c0_0] : memref<8x256xbf16, #tpu.memory_space<vmem>>, vector<8x256xbf16>
    %c0_1 = arith.constant 0 : index
    %c0_2 = arith.constant 0 : index
    %1 = vector.load %arg2[%c0_1, %c0_2] : memref<256x256xbf16, #tpu.memory_space<vmem>>, vector<256x256xbf16>
    %cst = arith.constant dense<0.000000e+00> : vector<8x256xf32>
    %2 = tpu.matmul %0, %1, %cst {dimension_numbers = #tpu.dot_dimension_numbers<[1], [0], [0], [1], [0, 0, 1, 1], [], []>} : vector<8x256xbf16>, vector<256x256xbf16>, vector<8x256xf32> -> vector<8x256xf32>
    %3 = arith.truncf %2 : vector<8x256xf32> to vector<8x256xbf16>
    %c0_3 = arith.constant 0 : index
    %c0_4 = arith.constant 0 : index
    %c0_5 = arith.constant 0 : index
    %4 = vector.load %arg3[%c0_3, %c0_4, %c0_5] : memref<3x256x512xbf16, #tpu.memory_space<vmem>>, vector<1x256x512xbf16>
    %5 = vector.shape_cast %4 : vector<1x256x512xbf16> to vector<256x512xbf16>
    %cst_6 = arith.constant dense<0.000000e+00> : vector<8x512xf32>
    %6 = tpu.matmul %3, %5, %cst_6 {dimension_numbers = #tpu.dot_dimension_numbers<[1], [0], [0], [1], [0, 0, 1, 1], [], []>} : vector<8x256xbf16>, vector<256x512xbf16>, vector<8x512xf32> -> vector<8x512xf32>
    %7 = vector.extract_strided_slice %6 {offsets = [0, 0], sizes = [8, 256], strides = [1, 1]} : vector<8x512xf32> to vector<8x256xf32>
    %8 = vector.extract_strided_slice %6 {offsets = [0, 256], sizes = [8, 256], strides = [1, 1]} : vector<8x512xf32> to vector<8x256xf32>
    %9 = arith.mulf %7, %8 : vector<8x256xf32>
    %10 = arith.truncf %9 : vector<8x256xf32> to vector<8x256xbf16>
    %c1 = arith.constant 1 : index
    %c0_7 = arith.constant 0 : index
    %c0_8 = arith.constant 0 : index
    %11 = vector.load %arg3[%c1, %c0_7, %c0_8] : memref<3x256x512xbf16, #tpu.memory_space<vmem>>, vector<1x256x512xbf16>
    %12 = vector.shape_cast %11 : vector<1x256x512xbf16> to vector<256x512xbf16>
    %cst_9 = arith.constant dense<0.000000e+00> : vector<8x512xf32>
    %13 = tpu.matmul %10, %12, %cst_9 {dimension_numbers = #tpu.dot_dimension_numbers<[1], [0], [0], [1], [0, 0, 1, 1], [], []>} : vector<8x256xbf16>, vector<256x512xbf16>, vector<8x512xf32> -> vector<8x512xf32>
    %14 = vector.extract_strided_slice %13 {offsets = [0, 0], sizes = [8, 256], strides = [1, 1]} : vector<8x512xf32> to vector<8x256xf32>
    %15 = vector.extract_strided_slice %13 {offsets = [0, 256], sizes = [8, 256], strides = [1, 1]} : vector<8x512xf32> to vector<8x256xf32>
    %16 = arith.mulf %14, %15 : vector<8x256xf32>
    %17 = arith.truncf %16 : vector<8x256xf32> to vector<8x256xbf16>
    %c2 = arith.constant 2 : index
    %c0_10 = arith.constant 0 : index
    %c0_11 = arith.constant 0 : index
    %18 = vector.load %arg3[%c2, %c0_10, %c0_11] : memref<3x256x512xbf16, #tpu.memory_space<vmem>>, vector<1x256x512xbf16>
    %19 = vector.shape_cast %18 : vector<1x256x512xbf16> to vector<256x512xbf16>
    %cst_12 = arith.constant dense<0.000000e+00> : vector<8x512xf32>
    %20 = tpu.matmul %17, %19, %cst_12 {dimension_numbers = #tpu.dot_dimension_numbers<[1], [0], [0], [1], [0, 0, 1, 1], [], []>} : vector<8x256xbf16>, vector<256x512xbf16>, vector<8x512xf32> -> vector<8x512xf32>
    %21 = vector.extract_strided_slice %20 {offsets = [0, 0], sizes = [8, 256], strides = [1, 1]} : vector<8x512xf32> to vector<8x256xf32>
    %22 = vector.extract_strided_slice %20 {offsets = [0, 256], sizes = [8, 256], strides = [1, 1]} : vector<8x512xf32> to vector<8x256xf32>
    %23 = arith.mulf %21, %22 : vector<8x256xf32>
    %24 = arith.truncf %23 : vector<8x256xf32> to vector<8x256xbf16>
    %c0_13 = arith.constant 0 : index
    %c0_14 = arith.constant 0 : index
    %25 = vector.load %arg4[%c0_13, %c0_14] : memref<256x128xbf16, #tpu.memory_space<vmem>>, vector<256x128xbf16>
    %cst_15 = arith.constant dense<0.000000e+00> : vector<8x128xf32>
    %26 = tpu.matmul %24, %25, %cst_15 {dimension_numbers = #tpu.dot_dimension_numbers<[1], [0], [0], [1], [0, 0, 1, 1], [], []>} : vector<8x256xbf16>, vector<256x128xbf16>, vector<8x128xf32> -> vector<8x128xf32>
    %c0_16 = arith.constant 0 : index
    %c0_17 = arith.constant 0 : index
    %27 = vector.load %arg5[%c0_16, %c0_17] : memref<8x128xf32, #tpu.memory_space<vmem>>, vector<8x128xf32>
    tpu.vector_store %arg5[%c0_16, %c0_17], %26 {strides = array<i32>} : memref<8x128xf32, #tpu.memory_space<vmem>>, vector<8x128xf32>,
    return
  }
  func.func @transform_0(%arg0: i32) -> (i32, i32) {
    %c0_i32 = arith.constant 0 : i32
    %c0_i32_0 = arith.constant 0 : i32
    return %arg0, %c0_i32 : i32, i32
  }
  func.func @transform_1(%arg0: i32) -> (i32, i32) {
    %c0_i32 = arith.constant 0 : i32
    %c0_i32_0 = arith.constant 0 : i32
    %c0_i32_1 = arith.constant 0 : i32
    return %c0_i32, %c0_i32_0 : i32, i32
  }
  func.func @transform_2(%arg0: i32) -> (i32, i32, i32) {
    %c0_i32 = arith.constant 0 : i32
    %c0_i32_0 = arith.constant 0 : i32
    %c0_i32_1 = arith.constant 0 : i32
    %c0_i32_2 = arith.constant 0 : i32
    return %c0_i32, %c0_i32_0, %c0_i32_1 : i32, i32, i32
  }
  func.func @transform_3(%arg0: i32) -> (i32, i32) {
    %c0_i32 = arith.constant 0 : i32
    %c0_i32_0 = arith.constant 0 : i32
    %c0_i32_1 = arith.constant 0 : i32
    return %c0_i32, %c0_i32_0 : i32, i32
  }
  func.func @transform_4(%arg0: i32) -> (i32, i32) {
    %c0_i32 = arith.constant 0 : i32
    %c0_i32_0 = arith.constant 0 : i32
    return %arg0, %c0_i32 : i32, i32
  }
}

</mosaic_0001>

<llo_original>
// kernel: tpu_custom_call.1
$region0: #{tpu_custom_call.1}
  #allocation0 [shape = 'u32[]', space=smem, size = 0x4, offset = 0x4, fixed_abs, tag = 'smem constant byte address 0x4 - core index']
  #allocation1 [shape = 'u32[144,128]{1,0:T(1,128)}', space=vmem, size = 0x12000, scoped, tag = 'internal scratch']
  %s0 = inlined_call_operand.hbm [shape: bf16[8,256], index: 0, kind: input, shape index: {}]
  %s1 = inlined_call_operand.hbm [shape: bf16[256,256], index: 1, kind: input, shape index: {}]
  %s2 = inlined_call_operand.hbm [shape: bf16[3,256,512], index: 2, kind: input, shape index: {}]
  %s3 = inlined_call_operand.hbm [shape: bf16[256,128], index: 3, kind: input, shape index: {}]
  %s4 = inlined_call_operand.hbm [shape: f32[8,128], index: 4, kind: output, shape index: {}]
  %s5 = sld [smem:[#allocation0]]
  $region42: #{tpu_custom_call.1} parent=0
    _
  %s7 = ssub.s32 1, %s5
  %s8 = scalar_select 0, %s7, %s5
  $region1: #{tpu_custom_call.1} parent=0
    #allocation2 [shape = 'u8[4096]{0}', space=vmem, size = 0x1000, scoped, tag = 'input window, operand 0, single buffered']
    #allocation3 [shape = 's32[1]{0}', space=sflag, size = 0x4, scoped, tag = 'scoped memory for tpu_custom_call.1']
    #allocation4 [shape = 's32[1]{0}', space=sflag, size = 0x4, scoped, tag = 'scoped memory for tpu_custom_call.1']
    #allocation5 [shape = 'u8[131072]{0}', space=vmem, size = 0x20000, scoped, tag = 'input window, operand 1, single buffered']
    #allocation6 [shape = 's32[1]{0}', space=sflag, size = 0x4, scoped, tag = 'scoped memory for tpu_custom_call.1']
    #allocation7 [shape = 'u8[786432]{0}', space=vmem, size = 0xc0000, scoped, tag = 'input window, operand 2, single buffered']
    #allocation8 [shape = 'u8[65536]{0}', space=vmem, size = 0x10000, scoped, tag = 'input window, operand 3, single buffered']
    #allocation9 [shape = 's32[1]{0}', space=sflag, size = 0x4, scoped, tag = 'scoped memory for tpu_custom_call.1']
    #allocation10 [shape = 'u8[4096]{0}', space=vmem, size = 0x1000, scoped, tag = 'output window, operand 0, single buffered']
    %9 = vsyncpa [#allocation3], 0
    %10 = vsyncpa [#allocation6], 0
    %11 = vsyncpa [#allocation9], 0
    %12 = vsyncpa [#allocation4], 0
    // Predicated region
    $region2: #{tpu_custom_call.1} parent=1 // pred_check
      _
    $region3: #{tpu_custom_call.1} parent=1 // pred_check_branch
      %14 = sbr.rel (0) target = $region5
    $region4: #{tpu_custom_call.1} parent=1 // pred_region
      %s16 = ssub.s32 128, 128
      %17 = vsyncadd [#allocation3], %s16
      %s19 = sshll.u32 [#allocation2], 4
      %s20 = int_to_ptr.vmem [resolvable:$true] %s19
      %22 = dma.hbm_to_vmem [thread:$0]  %s0, 128, %s20, [#allocation3]
    $region5: #{tpu_custom_call.1} parent=1 // pred_fallthru
      _
    // Predicated region
    $region6: #{tpu_custom_call.1} parent=1 // pred_check
      _
    $region7: #{tpu_custom_call.1} parent=1 // pred_check_branch
      %24 = sbr.rel (0) target = $region9
    $region8: #{tpu_custom_call.1} parent=1 // pred_region
      %s26 = ssub.s32 4096, 4096
      %27 = vsyncadd [#allocation6], %s26
      %s28 = sshll.u32 [#allocation5], 4
      %s29 = int_to_ptr.vmem [resolvable:$true] %s28
      %34 = dma.hbm_to_vmem [thread:$0]  %s1, 4096, %s29, [#allocation6], 128, 128, 8
    $region9: #{tpu_custom_call.1} parent=1 // pred_fallthru
      _
    // Predicated region
    $region10: #{tpu_custom_call.1} parent=1 // pred_check
      _
    $region11: #{tpu_custom_call.1} parent=1 // pred_check_branch
      %36 = sbr.rel (0) target = $region13
    $region12: #{tpu_custom_call.1} parent=1 // pred_region
      %s38 = ssub.s32 24576, 24576
      %39 = vsyncadd [#allocation6], %s38
      %s40 = sshll.u32 [#allocation7], 4
      %s41 = int_to_ptr.vmem [resolvable:$true] %s40
      %46 = dma.hbm_to_vmem [thread:$0]  %s2, 24576, %s41, [#allocation6], 256, 256, 16
    $region13: #{tpu_custom_call.1} parent=1 // pred_fallthru
      _
    // Predicated region
    $region14: #{tpu_custom_call.1} parent=1 // pred_check
      _
    $region15: #{tpu_custom_call.1} parent=1 // pred_check_branch
      %48 = sbr.rel (0) target = $region17
    $region16: #{tpu_custom_call.1} parent=1 // pred_region
      %s50 = ssub.s32 2048, 2048
      %51 = vsyncadd [#allocation9], %s50
      %s52 = sshll.u32 [#allocation8], 4
      %s53 = int_to_ptr.vmem [resolvable:$true] %s52
      %58 = dma.hbm_to_vmem [thread:$0]  %s3, 2048, %s53, [#allocation9], 64, 64, 4
    $region17: #{tpu_custom_call.1} parent=1 // pred_fallthru
      _
    // Predicated region
    $region18: #{tpu_custom_call.1} parent=1 // pred_check
      _
    $region19: #{tpu_custom_call.1} parent=1 // pred_check_branch
      %60 = sbr.rel (0) target = $region21
    $region20: #{tpu_custom_call.1} parent=1 // pred_region
      %61 = dma.done [#allocation3], 128
    $region21: #{tpu_custom_call.1} parent=1 // pred_fallthru
      _
    // Predicated region
    $region22: #{tpu_custom_call.1} parent=1 // pred_check
      _
    $region23: #{tpu_custom_call.1} parent=1 // pred_check_branch
      %63 = sbr.rel (0) target = $region25
    $region24: #{tpu_custom_call.1} parent=1 // pred_region
      %64 = dma.done [#allocation6], 4096
    $region25: #{tpu_custom_call.1} parent=1 // pred_fallthru
      _
    // Predicated region
    $region26: #{tpu_custom_call.1} parent=1 // pred_check
      _
    $region27: #{tpu_custom_call.1} parent=1 // pred_check_branch
      %66 = sbr.rel (0) target = $region29
    $region28: #{tpu_custom_call.1} parent=1 // pred_region
      %67 = dma.done [#allocation6], 24576
    $region29: #{tpu_custom_call.1} parent=1 // pred_fallthru
      _
    // Predicated region
    $region30: #{tpu_custom_call.1} parent=1 // pred_check
      _
    $region31: #{tpu_custom_call.1} parent=1 // pred_check_branch
      %69 = sbr.rel (0) target = $region33
    $region32: #{tpu_custom_call.1} parent=1 // pred_region
      %70 = dma.done [#allocation9], 2048
    $region33: #{tpu_custom_call.1} parent=1 // pred_fallthru
      _
    %v72 = vld [vmem:[#allocation2] sm:$0xff]
    %v73 = vld [vmem:[#allocation5] sm:$0xff]
    %v74 = vld [vmem:[#allocation5 + $0x8] sm:$0xff]
    %v75 = vld [vmem:[#allocation5 + $0x10] sm:$0xff]
    %v76 = vld [vmem:[#allocation5 + $0x18] sm:$0xff]
    %v77 = vld [vmem:[#allocation5 + $0x20] sm:$0xff]
    %v78 = vld [vmem:[#allocation5 + $0x28] sm:$0xff]
    %v79 = vld [vmem:[#allocation5 + $0x30] sm:$0xff]
    %v80 = vld [vmem:[#allocation5 + $0x38] sm:$0xff]
    %v81 = vld [vmem:[#allocation5 + $0x40] sm:$0xff]
    %v82 = vld [vmem:[#allocation5 + $0x48] sm:$0xff]
    %v83 = vld [vmem:[#allocation5 + $0x50] sm:$0xff]
    %v84 = vld [vmem:[#allocation5 + $0x58] sm:$0xff]
    %v85 = vld [vmem:[#allocation5 + $0x60] sm:$0xff]
    %v86 = vld [vmem:[#allocation5 + $0x68] sm:$0xff]
    %v87 = vld [vmem:[#allocation5 + $0x70] sm:$0xff]
    %v88 = vld [vmem:[#allocation5 + $0x78] sm:$0xff]
    %v89 = vld [vmem:[#allocation5 + $0x80] sm:$0xff]
    %v90 = vld [vmem:[#allocation5 + $0x88] sm:$0xff]
    %v91 = vld [vmem:[#allocation5 + $0x90] sm:$0xff]
    %v92 = vld [vmem:[#allocation5 + $0x98] sm:$0xff]
    %v93 = vld [vmem:[#allocation5 + $0xa0] sm:$0xff]
    %v94 = vld [vmem:[#allocation5 + $0xa8] sm:$0xff]
    %v95 = vld [vmem:[#allocation5 + $0xb0] sm:$0xff]
    %v96 = vld [vmem:[#allocation5 + $0xb8] sm:$0xff]
    %v97 = vld [vmem:[#allocation5 + $0xc0] sm:$0xff]
    %v98 = vld [vmem:[#allocation5 + $0xc8] sm:$0xff]
    %v99 = vld [vmem:[#allocation5 + $0xd0] sm:$0xff]
    %v100 = vld [vmem:[#allocation5 + $0xd8] sm:$0xff]
    %v101 = vld [vmem:[#allocation5 + $0xe0] sm:$0xff]
    %v102 = vld [vmem:[#allocation5 + $0xe8] sm:$0xff]
    %v103 = vld [vmem:[#allocation5 + $0xf0] sm:$0xff]
    %v104 = vld [vmem:[#allocation5 + $0xf8] sm:$0xff]
    %v106 = vunpack.c.l.b16 %v72
    %v107 = vunpack.c.h.b16 %v72
    %v108 = vpack.c.b16 %v106, %v106
    %v109 = vpack.c.b16 %v107, %v107
    %v144 = vunpack.c.l.b16 %v73
    %v145 = vunpack.c.h.b16 %v73
    %v146 = vunpack.c.l.b16 %v74
    %v147 = vunpack.c.h.b16 %v74
    %v148 = vunpack.c.l.b16 %v75
    %v149 = vunpack.c.h.b16 %v75
    %v150 = vunpack.c.l.b16 %v76
    %v151 = vunpack.c.h.b16 %v76
    %v152 = vunpack.c.l.b16 %v77
    %v153 = vunpack.c.h.b16 %v77
    %v154 = vunpack.c.l.b16 %v78
    %v155 = vunpack.c.h.b16 %v78
    %v156 = vunpack.c.l.b16 %v79
    %v157 = vunpack.c.h.b16 %v79
    %v158 = vunpack.c.l.b16 %v80
    %v159 = vunpack.c.h.b16 %v80
    %v160 = vunpack.c.l.b16 %v81
    %v161 = vunpack.c.h.b16 %v81
    %v162 = vunpack.c.l.b16 %v82
    %v163 = vunpack.c.h.b16 %v82
    %v164 = vunpack.c.l.b16 %v83
    %v165 = vunpack.c.h.b16 %v83
    %v166 = vunpack.c.l.b16 %v84
    %v167 = vunpack.c.h.b16 %v84
    %v168 = vunpack.c.l.b16 %v85
    %v169 = vunpack.c.h.b16 %v85
    %v170 = vunpack.c.l.b16 %v86
    %v171 = vunpack.c.h.b16 %v86
    %v172 = vunpack.c.l.b16 %v87
    %v173 = vunpack.c.h.b16 %v87
    %v174 = vunpack.c.l.b16 %v88
    %v175 = vunpack.c.h.b16 %v88
    %v176 = vunpack.c.l.b16 %v89
    %v177 = vunpack.c.h.b16 %v89
    %v178 = vunpack.c.l.b16 %v90
    %v179 = vunpack.c.h.b16 %v90
    %v180 = vunpack.c.l.b16 %v91
    %v181 = vunpack.c.h.b16 %v91
    %v182 = vunpack.c.l.b16 %v92
    %v183 = vunpack.c.h.b16 %v92
    %v184 = vunpack.c.l.b16 %v93
    %v185 = vunpack.c.h.b16 %v93
    %v186 = vunpack.c.l.b16 %v94
    %v187 = vunpack.c.h.b16 %v94
    %v188 = vunpack.c.l.b16 %v95
    %v189 = vunpack.c.h.b16 %v95
    %v190 = vunpack.c.l.b16 %v96
    %v191 = vunpack.c.h.b16 %v96
    %v192 = vunpack.c.l.b16 %v97
    %v193 = vunpack.c.h.b16 %v97
    %v194 = vunpack.c.l.b16 %v98
    %v195 = vunpack.c.h.b16 %v98
    %v196 = vunpack.c.l.b16 %v99
    %v197 = vunpack.c.h.b16 %v99
    %v198 = vunpack.c.l.b16 %v100
    %v199 = vunpack.c.h.b16 %v100
    %v200 = vunpack.c.l.b16 %v101
    %v201 = vunpack.c.h.b16 %v101
    %v202 = vunpack.c.l.b16 %v102
    %v203 = vunpack.c.h.b16 %v102
    %v204 = vunpack.c.l.b16 %v103
    %v205 = vunpack.c.h.b16 %v103
    %v206 = vunpack.c.l.b16 %v104
    %v207 = vunpack.c.h.b16 %v104
    %v208 = vpack.c.b16 %v146, %v144
    %v209 = vpack.c.b16 %v147, %v145
    %v210 = vpack.c.b16 %v150, %v148
    %v211 = vpack.c.b16 %v151, %v149
    %v212 = vpack.c.b16 %v154, %v152
    %v213 = vpack.c.b16 %v155, %v153
    %v214 = vpack.c.b16 %v158, %v156
    %v215 = vpack.c.b16 %v159, %v157
    %v216 = vpack.c.b16 %v162, %v160
    %v217 = vpack.c.b16 %v163, %v161
    %v218 = vpack.c.b16 %v166, %v164
    %v219 = vpack.c.b16 %v167, %v165
    %v220 = vpack.c.b16 %v170, %v168
    %v221 = vpack.c.b16 %v171, %v169
    %v222 = vpack.c.b16 %v174, %v172
    %v223 = vpack.c.b16 %v175, %v173
    %v224 = vpack.c.b16 %v178, %v176
    %v225 = vpack.c.b16 %v179, %v177
    %v226 = vpack.c.b16 %v182, %v180
    %v227 = vpack.c.b16 %v183, %v181
    %v228 = vpack.c.b16 %v186, %v184
    %v229 = vpack.c.b16 %v187, %v185
    %v230 = vpack.c.b16 %v190, %v188
    %v231 = vpack.c.b16 %v191, %v189
    %v232 = vpack.c.b16 %v194, %v192
    %v233 = vpack.c.b16 %v195, %v193
    %v234 = vpack.c.b16 %v198, %v196
    %v235 = vpack.c.b16 %v199, %v197
    %v236 = vpack.c.b16 %v202, %v200
    %v237 = vpack.c.b16 %v203, %v201
    %v238 = vpack.c.b16 %v206, %v204
    %v239 = vpack.c.b16 %v207, %v205
    %272 = vmatprep.subr.bf16.mxu0 %v223
    %273 = vmatpush1.bf16.msra.mxu0 %v222
    %274 = vmatprep.subr.bf16.mxu0 %v221
    %275 = vmatpush1.bf16.msra.mxu0 %v220
    %276 = vmatprep.subr.bf16.mxu0 %v219
    %277 = vmatpush1.bf16.msra.mxu0 %v218
    %278 = vmatprep.subr.bf16.mxu0 %v217
    %279 = vmatpush1.bf16.msra.mxu0 %v216
    %280 = vmatprep.subr.bf16.mxu0 %v215
    %281 = vmatpush1.bf16.msra.mxu0 %v214
    %282 = vmatprep.subr.bf16.mxu0 %v213
    %283 = vmatpush1.bf16.msra.mxu0 %v212
    %284 = vmatprep.subr.bf16.mxu0 %v211
    %285 = vmatpush1.bf16.msra.mxu0 %v210
    %286 = vmatprep.subr.bf16.mxu0 %v209
    %287 = vmatpush1.bf16.msra.mxu0 %v208
    %288 = vmatprep.subr.bf16.mxu0 %v239
    %289 = vmatpush2.bf16.msra.mxu0 %v238
    %290 = vmatprep.subr.bf16.mxu0 %v237
    %291 = vmatpush2.bf16.msra.mxu0 %v236
    %292 = vmatprep.subr.bf16.mxu0 %v235
    %293 = vmatpush2.bf16.msra.mxu0 %v234
    %294 = vmatprep.subr.bf16.mxu0 %v233
    %295 = vmatpush2.bf16.msra.mxu0 %v232
    %296 = vmatprep.subr.bf16.mxu0 %v231
    %297 = vmatpush2.bf16.msra.mxu0 %v230
    %298 = vmatprep.subr.bf16.mxu0 %v229
    %299 = vmatpush2.bf16.msra.mxu0 %v228
    %300 = vmatprep.subr.bf16.mxu0 %v227
    %301 = vmatpush2.bf16.msra.mxu0 %v226
    %302 = vmatprep.subr.bf16.mxu0 %v225
    %303 = vmatpush2.bf16.msra.mxu0 %v224
    %304 = vmatprep.mubr.bf16.mxu0 %v109
    %305 = vmatmul.mubr.bf16.gmra.mxu0 %v108
    %v306 = vpop.f32.mrf.mxu0
    %v307 = vadd.f32 0.0, %v306
    %v308 = vpop.f32.mrf.mxu0
    %v309 = vadd.f32 0.0, %v308
    %v310 = vpop.f32.mrf.mxu0
    %v311 = vpop.f32.mrf.mxu0
    %312 = vdwg.mxu0
    %v313 = vpack.c.bf16 %v307, %v307
    %v314 = vpack.c.bf16 %v309, %v309
    %v315 = vld [vmem:[#allocation7] sm:$0xff]
    %v316 = vld [vmem:[#allocation7 + $0x8] sm:$0xff]
    %v317 = vld [vmem:[#allocation7 + $0x10] sm:$0xff]
    %v318 = vld [vmem:[#allocation7 + $0x18] sm:$0xff]
    %v319 = vld [vmem:[#allocation7 + $0x20] sm:$0xff]
    %v320 = vld [vmem:[#allocation7 + $0x28] sm:$0xff]
    %v321 = vld [vmem:[#allocation7 + $0x30] sm:$0xff]
    %v322 = vld [vmem:[#allocation7 + $0x38] sm:$0xff]
    %v323 = vld [vmem:[#allocation7 + $0x40] sm:$0xff]
    %v324 = vld [vmem:[#allocation7 + $0x48] sm:$0xff]
    %v325 = vld [vmem:[#allocation7 + $0x50] sm:$0xff]
    %v326 = vld [vmem:[#allocation7 + $0x58] sm:$0xff]
    %v327 = vld [vmem:[#allocation7 + $0x60] sm:$0xff]
    %v328 = vld [vmem:[#allocation7 + $0x68] sm:$0xff]
    %v329 = vld [vmem:[#allocation7 + $0x70] sm:$0xff]
    %v330 = vld [vmem:[#allocation7 + $0x78] sm:$0xff]
    %v331 = vld [vmem:[#allocation7 + $0x80] sm:$0xff]
    %v332 = vld [vmem:[#allocation7 + $0x88] sm:$0xff]
    %v333 = vld [vmem:[#allocation7 + $0x90] sm:$0xff]
    %v334 = vld [vmem:[#allocation7 + $0x98] sm:$0xff]
    %v335 = vld [vmem:[#allocation7 + $0xa0] sm:$0xff]
    %v336 = vld [vmem:[#allocation7 + $0xa8] sm:$0xff]
    %v337 = vld [vmem:[#allocation7 + $0xb0] sm:$0xff]
    %v338 = vld [vmem:[#allocation7 + $0xb8] sm:$0xff]
    %v339 = vld [vmem:[#allocation7 + $0xc0] sm:$0xff]
    %v340 = vld [vmem:[#allocation7 + $0xc8] sm:$0xff]
    %v341 = vld [vmem:[#allocation7 + $0xd0] sm:$0xff]
    %v342 = vld [vmem:[#allocation7 + $0xd8] sm:$0xff]
    %v343 = vld [vmem:[#allocation7 + $0xe0] sm:$0xff]
    %v344 = vld [vmem:[#allocation7 + $0xe8] sm:$0xff]
    %v345 = vld [vmem:[#allocation7 + $0xf0] sm:$0xff]
    %v346 = vld [vmem:[#allocation7 + $0xf8] sm:$0xff]
    %v347 = vld [vmem:[#allocation7 + $0x100] sm:$0xff]
    %v348 = vld [vmem:[#allocation7 + $0x108] sm:$0xff]
    %v349 = vld [vmem:[#allocation7 + $0x110] sm:$0xff]
    %v350 = vld [vmem:[#allocation7 + $0x118] sm:$0xff]
    %v351 = vld [vmem:[#allocation7 + $0x120] sm:$0xff]
    %v352 = vld [vmem:[#allocation7 + $0x128] sm:$0xff]
    %v353 = vld [vmem:[#allocation7 + $0x130] sm:$0xff]
    %v354 = vld [vmem:[#allocation7 + $0x138] sm:$0xff]
    %v355 = vld [vmem:[#allocation7 + $0x140] sm:$0xff]
    %v356 = vld [vmem:[#allocation7 + $0x148] sm:$0xff]
    %v357 = vld [vmem:[#allocation7 + $0x150] sm:$0xff]
    %v358 = vld [vmem:[#allocation7 + $0x158] sm:$0xff]
    %v359 = vld [vmem:[#allocation7 + $0x160] sm:$0xff]
    %v360 = vld [vmem:[#allocation7 + $0x168] sm:$0xff]
    %v361 = vld [vmem:[#allocation7 + $0x170] sm:$0xff]
    %v362 = vld [vmem:[#allocation7 + $0x178] sm:$0xff]
    %v363 = vld [vmem:[#allocation7 + $0x180] sm:$0xff]
    %v364 = vld [vmem:[#allocation7 + $0x188] sm:$0xff]
    %v365 = vld [vmem:[#allocation7 + $0x190] sm:$0xff]
    %v366 = vld [vmem:[#allocation7 + $0x198] sm:$0xff]
    %v367 = vld [vmem:[#allocation7 + $0x1a0] sm:$0xff]
    %v368 = vld [vmem:[#allocation7 + $0x1a8] sm:$0xff]
    %v369 = vld [vmem:[#allocation7 + $0x1b0] sm:$0xff]
    %v370 = vld [vmem:[#allocation7 + $0x1b8] sm:$0xff]
    %v371 = vld [vmem:[#allocation7 + $0x1c0] sm:$0xff]
    %v372 = vld [vmem:[#allocation7 + $0x1c8] sm:$0xff]
    %v373 = vld [vmem:[#allocation7 + $0x1d0] sm:$0xff]
    %v374 = vld [vmem:[#allocation7 + $0x1d8] sm:$0xff]
    %v375 = vld [vmem:[#allocation7 + $0x1e0] sm:$0xff]
    %v376 = vld [vmem:[#allocation7 + $0x1e8] sm:$0xff]
    %v377 = vld [vmem:[#allocation7 + $0x1f0] sm:$0xff]
    %v378 = vld [vmem:[#allocation7 + $0x1f8] sm:$0xff]
    %v443 = vunpack.c.l.b16 %v315
    %v444 = vunpack.c.h.b16 %v315
    %v445 = vunpack.c.l.b16 %v316
    %v446 = vunpack.c.h.b16 %v316
    %v447 = vunpack.c.l.b16 %v317
    %v448 = vunpack.c.h.b16 %v317
    %v449 = vunpack.c.l.b16 %v318
    %v450 = vunpack.c.h.b16 %v318
    %v451 = vunpack.c.l.b16 %v319
    %v452 = vunpack.c.h.b16 %v319
    %v453 = vunpack.c.l.b16 %v320
    %v454 = vunpack.c.h.b16 %v320
    %v455 = vunpack.c.l.b16 %v321
    %v456 = vunpack.c.h.b16 %v321
    %v457 = vunpack.c.l.b16 %v322
    %v458 = vunpack.c.h.b16 %v322
    %v459 = vunpack.c.l.b16 %v323
    %v460 = vunpack.c.h.b16 %v323
    %v461 = vunpack.c.l.b16 %v324
    %v462 = vunpack.c.h.b16 %v324
    %v463 = vunpack.c.l.b16 %v325
    %v464 = vunpack.c.h.b16 %v325
    %v465 = vunpack.c.l.b16 %v326
    %v466 = vunpack.c.h.b16 %v326
    %v467 = vunpack.c.l.b16 %v327
    %v468 = vunpack.c.h.b16 %v327
    %v469 = vunpack.c.l.b16 %v328
    %v470 = vunpack.c.h.b16 %v328
    %v471 = vunpack.c.l.b16 %v329
    %v472 = vunpack.c.h.b16 %v329
    %v473 = vunpack.c.l.b16 %v330
    %v474 = vunpack.c.h.b16 %v330
    %v475 = vunpack.c.l.b16 %v331
    %v476 = vunpack.c.h.b16 %v331
    %v477 = vunpack.c.l.b16 %v332
    %v478 = vunpack.c.h.b16 %v332
    %v479 = vunpack.c.l.b16 %v333
    %v480 = vunpack.c.h.b16 %v333
    %v481 = vunpack.c.l.b16 %v334
    %v482 = vunpack.c.h.b16 %v334
    %v483 = vunpack.c.l.b16 %v335
    %v484 = vunpack.c.h.b16 %v335
    %v485 = vunpack.c.l.b16 %v336
    %v486 = vunpack.c.h.b16 %v336
    %v487 = vunpack.c.l.b16 %v337
    %v488 = vunpack.c.h.b16 %v337
    %v489 = vunpack.c.l.b16 %v338
    %v490 = vunpack.c.h.b16 %v338
    %v491 = vunpack.c.l.b16 %v339
    %v492 = vunpack.c.h.b16 %v339
    %v493 = vunpack.c.l.b16 %v340
    %v494 = vunpack.c.h.b16 %v340
    %v495 = vunpack.c.l.b16 %v341
    %v496 = vunpack.c.h.b16 %v341
    %v497 = vunpack.c.l.b16 %v342
    %v498 = vunpack.c.h.b16 %v342
    %v499 = vunpack.c.l.b16 %v343
    %v500 = vunpack.c.h.b16 %v343
    %v501 = vunpack.c.l.b16 %v344
    %v502 = vunpack.c.h.b16 %v344
    %v503 = vunpack.c.l.b16 %v345
    %v504 = vunpack.c.h.b16 %v345
    %v505 = vunpack.c.l.b16 %v346
    %v506 = vunpack.c.h.b16 %v346
    %v507 = vunpack.c.l.b16 %v347
    %v508 = vunpack.c.h.b16 %v347
    %v509 = vunpack.c.l.b16 %v348
    %v510 = vunpack.c.h.b16 %v348
    %v511 = vunpack.c.l.b16 %v349
    %v512 = vunpack.c.h.b16 %v349
    %v513 = vunpack.c.l.b16 %v350
    %v514 = vunpack.c.h.b16 %v350
    %v515 = vunpack.c.l.b16 %v351
    %v516 = vunpack.c.h.b16 %v351
    %v517 = vunpack.c.l.b16 %v352
    %v518 = vunpack.c.h.b16 %v352
    %v519 = vunpack.c.l.b16 %v353
    %v520 = vunpack.c.h.b16 %v353
    %v521 = vunpack.c.l.b16 %v354
    %v522 = vunpack.c.h.b16 %v354
    %v523 = vunpack.c.l.b16 %v355
    %v524 = vunpack.c.h.b16 %v355
    %v525 = vunpack.c.l.b16 %v356
    %v526 = vunpack.c.h.b16 %v356
    %v527 = vunpack.c.l.b16 %v357
    %v528 = vunpack.c.h.b16 %v357
    %v529 = vunpack.c.l.b16 %v358
    %v530 = vunpack.c.h.b16 %v358
    %v531 = vunpack.c.l.b16 %v359
    %v532 = vunpack.c.h.b16 %v359
    %v533 = vunpack.c.l.b16 %v360
    %v534 = vunpack.c.h.b16 %v360
    %v535 = vunpack.c.l.b16 %v361
    %v536 = vunpack.c.h.b16 %v361
    %v537 = vunpack.c.l.b16 %v362
    %v538 = vunpack.c.h.b16 %v362
    %v539 = vunpack.c.l.b16 %v363
    %v540 = vunpack.c.h.b16 %v363
    %v541 = vunpack.c.l.b16 %v364
    %v542 = vunpack.c.h.b16 %v364
    %v543 = vunpack.c.l.b16 %v365
    %v544 = vunpack.c.h.b16 %v365
    %v545 = vunpack.c.l.b16 %v366
    %v546 = vunpack.c.h.b16 %v366
    %v547 = vunpack.c.l.b16 %v367
    %v548 = vunpack.c.h.b16 %v367
    %v549 = vunpack.c.l.b16 %v368
    %v550 = vunpack.c.h.b16 %v368
    %v551 = vunpack.c.l.b16 %v369
    %v552 = vunpack.c.h.b16 %v369
    %v553 = vunpack.c.l.b16 %v370
    %v554 = vunpack.c.h.b16 %v370
    %v555 = vunpack.c.l.b16 %v371
    %v556 = vunpack.c.h.b16 %v371
    %v557 = vunpack.c.l.b16 %v372
    %v558 = vunpack.c.h.b16 %v372
    %v559 = vunpack.c.l.b16 %v373
    %v560 = vunpack.c.h.b16 %v373
    %v561 = vunpack.c.l.b16 %v374
    %v562 = vunpack.c.h.b16 %v374
    %v563 = vunpack.c.l.b16 %v375
    %v564 = vunpack.c.h.b16 %v375
    %v565 = vunpack.c.l.b16 %v376
    %v566 = vunpack.c.h.b16 %v376
    %v567 = vunpack.c.l.b16 %v377
    %v568 = vunpack.c.h.b16 %v377
    %v569 = vunpack.c.l.b16 %v378
    %v570 = vunpack.c.h.b16 %v378
    %v571 = vpack.c.b16 %v447, %v443
    %v572 = vpack.c.b16 %v448, %v444
    %v573 = vpack.c.b16 %v449, %v445
    %v574 = vpack.c.b16 %v450, %v446
    %v575 = vpack.c.b16 %v455, %v451
    %v576 = vpack.c.b16 %v456, %v452
    %v577 = vpack.c.b16 %v457, %v453
    %v578 = vpack.c.b16 %v458, %v454
    %v579 = vpack.c.b16 %v463, %v459
    %v580 = vpack.c.b16 %v464, %v460
    %v581 = vpack.c.b16 %v465, %v461
    %v582 = vpack.c.b16 %v466, %v462
    %v583 = vpack.c.b16 %v471, %v467
    %v584 = vpack.c.b16 %v472, %v468
    %v585 = vpack.c.b16 %v473, %v469
    %v586 = vpack.c.b16 %v474, %v470
    %v587 = vpack.c.b16 %v479, %v475
    %v588 = vpack.c.b16 %v480, %v476
    %v589 = vpack.c.b16 %v481, %v477
    %v590 = vpack.c.b16 %v482, %v478
    %v591 = vpack.c.b16 %v487, %v483
    %v592 = vpack.c.b16 %v488, %v484
    %v593 = vpack.c.b16 %v489, %v485
    %v594 = vpack.c.b16 %v490, %v486
    %v595 = vpack.c.b16 %v495, %v491
    %v596 = vpack.c.b16 %v496, %v492
    %v597 = vpack.c.b16 %v497, %v493
    %v598 = vpack.c.b16 %v498, %v494
    %v599 = vpack.c.b16 %v503, %v499
    %v600 = vpack.c.b16 %v504, %v500
    %v601 = vpack.c.b16 %v505, %v501
    %v602 = vpack.c.b16 %v506, %v502
    %v603 = vpack.c.b16 %v511, %v507
    %v604 = vpack.c.b16 %v512, %v508
    %v605 = vpack.c.b16 %v513, %v509
    %v606 = vpack.c.b16 %v514, %v510
    %v607 = vpack.c.b16 %v519, %v515
    %v608 = vpack.c.b16 %v520, %v516
    %v609 = vpack.c.b16 %v521, %v517
    %v610 = vpack.c.b16 %v522, %v518
    %v611 = vpack.c.b16 %v527, %v523
    %v612 = vpack.c.b16 %v528, %v524
    %v613 = vpack.c.b16 %v529, %v525
    %v614 = vpack.c.b16 %v530, %v526
    %v615 = vpack.c.b16 %v535, %v531
    %v616 = vpack.c.b16 %v536, %v532
    %v617 = vpack.c.b16 %v537, %v533
    %v618 = vpack.c.b16 %v538, %v534
    %v619 = vpack.c.b16 %v543, %v539
    %v620 = vpack.c.b16 %v544, %v540
    %v621 = vpack.c.b16 %v545, %v541
    %v622 = vpack.c.b16 %v546, %v542
    %v623 = vpack.c.b16 %v551, %v547
    %v624 = vpack.c.b16 %v552, %v548
    %v625 = vpack.c.b16 %v553, %v549
    %v626 = vpack.c.b16 %v554, %v550
    %v627 = vpack.c.b16 %v559, %v555
    %v628 = vpack.c.b16 %v560, %v556
    %v629 = vpack.c.b16 %v561, %v557
    %v630 = vpack.c.b16 %v562, %v558
    %v631 = vpack.c.b16 %v567, %v563
    %v632 = vpack.c.b16 %v568, %v564
    %v633 = vpack.c.b16 %v569, %v565
    %v634 = vpack.c.b16 %v570, %v566
    %699 = vmatprep.subr.bf16.mxu0 %v600
    %700 = vmatpush1.bf16.msra.mxu0 %v599
    %701 = vmatprep.subr.bf16.mxu0 %v596
    %702 = vmatpush1.bf16.msra.mxu0 %v595
    %703 = vmatprep.subr.bf16.mxu0 %v592
    %704 = vmatpush1.bf16.msra.mxu0 %v591
    %705 = vmatprep.subr.bf16.mxu0 %v588
    %706 = vmatpush1.bf16.msra.mxu0 %v587
    %707 = vmatprep.subr.bf16.mxu0 %v584
    %708 = vmatpush1.bf16.msra.mxu0 %v583
    %709 = vmatprep.subr.bf16.mxu0 %v580
    %710 = vmatpush1.bf16.msra.mxu0 %v579
    %711 = vmatprep.subr.bf16.mxu0 %v576
    %712 = vmatpush1.bf16.msra.mxu0 %v575
    %713 = vmatprep.subr.bf16.mxu0 %v572
    %714 = vmatpush1.bf16.msra.mxu0 %v571
    %715 = vmatprep.subr.bf16.mxu0 %v632
    %716 = vmatpush2.bf16.msra.mxu0 %v631
    %717 = vmatprep.subr.bf16.mxu0 %v628
    %718 = vmatpush2.bf16.msra.mxu0 %v627
    %719 = vmatprep.subr.bf16.mxu0 %v624
    %720 = vmatpush2.bf16.msra.mxu0 %v623
    %721 = vmatprep.subr.bf16.mxu0 %v620
    %722 = vmatpush2.bf16.msra.mxu0 %v619
    %723 = vmatprep.subr.bf16.mxu0 %v616
    %724 = vmatpush2.bf16.msra.mxu0 %v615
    %725 = vmatprep.subr.bf16.mxu0 %v612
    %726 = vmatpush2.bf16.msra.mxu0 %v611
    %727 = vmatprep.subr.bf16.mxu0 %v608
    %728 = vmatpush2.bf16.msra.mxu0 %v607
    %729 = vmatprep.subr.bf16.mxu0 %v604
    %730 = vmatpush2.bf16.msra.mxu0 %v603
    %731 = vmatprep.mubr.bf16.mxu0 %v314
    %732 = vmatmul.mubr.bf16.gmra.mxu0 %v313
    %v733 = vpop.f32.mrf.mxu0
    %v734 = vadd.f32 0.0, %v733
    %v735 = vpop.f32.mrf.mxu0
    %v736 = vadd.f32 0.0, %v735
    %v737 = vpop.f32.mrf.mxu0
    %v738 = vpop.f32.mrf.mxu0
    %739 = vdwg.mxu0
    %740 = vmatprep.subr.bf16.mxu0 %v602
    %741 = vmatpush1.bf16.msra.mxu0 %v601
    %742 = vmatprep.subr.bf16.mxu0 %v598
    %743 = vmatpush1.bf16.msra.mxu0 %v597
    %744 = vmatprep.subr.bf16.mxu0 %v594
    %745 = vmatpush1.bf16.msra.mxu0 %v593
    %746 = vmatprep.subr.bf16.mxu0 %v590
    %747 = vmatpush1.bf16.msra.mxu0 %v589
    %748 = vmatprep.subr.bf16.mxu0 %v586
    %749 = vmatpush1.bf16.msra.mxu0 %v585
    %750 = vmatprep.subr.bf16.mxu0 %v582
    %751 = vmatpush1.bf16.msra.mxu0 %v581
    %752 = vmatprep.subr.bf16.mxu0 %v578
    %753 = vmatpush1.bf16.msra.mxu0 %v577
    %754 = vmatprep.subr.bf16.mxu0 %v574
    %755 = vmatpush1.bf16.msra.mxu0 %v573
    %756 = vmatprep.subr.bf16.mxu0 %v634
    %757 = vmatpush2.bf16.msra.mxu0 %v633
    %758 = vmatprep.subr.bf16.mxu0 %v630
    %759 = vmatpush2.bf16.msra.mxu0 %v629
    %760 = vmatprep.subr.bf16.mxu0 %v626
    %761 = vmatpush2.bf16.msra.mxu0 %v625
    %762 = vmatprep.subr.bf16.mxu0 %v622
    %763 = vmatpush2.bf16.msra.mxu0 %v621
    %764 = vmatprep.subr.bf16.mxu0 %v618
    %765 = vmatpush2.bf16.msra.mxu0 %v617
    %766 = vmatprep.subr.bf16.mxu0 %v614
    %767 = vmatpush2.bf16.msra.mxu0 %v613
    %768 = vmatprep.subr.bf16.mxu0 %v610
    %769 = vmatpush2.bf16.msra.mxu0 %v609
    %770 = vmatprep.subr.bf16.mxu0 %v606
    %771 = vmatpush2.bf16.msra.mxu0 %v605
    %772 = vmatprep.mubr.bf16.mxu0 %v314
    %773 = vmatmul.mubr.bf16.gmra.mxu0 %v313
    %v774 = vpop.f32.mrf.mxu0
    %v775 = vadd.f32 0.0, %v774
    %v776 = vpop.f32.mrf.mxu0
    %v777 = vadd.f32 0.0, %v776
    %v778 = vpop.f32.mrf.mxu0
    %v779 = vpop.f32.mrf.mxu0
    %780 = vdwg.mxu0
    %v781 = vmul.f32 %v734, %v775
    %v782 = vmul.f32 %v736, %v777
    %v783 = vpack.c.bf16 %v781, %v781
    %v784 = vpack.c.bf16 %v782, %v782
    %s785 = scalar_lea.vmem [#allocation7], 512
    %v786 = vld [vmem:[%s785] sm:$0xff]
    %v787 = vld [vmem:[%s785 + $0x8] sm:$0xff]
    %v788 = vld [vmem:[%s785 + $0x10] sm:$0xff]
    %v789 = vld [vmem:[%s785 + $0x18] sm:$0xff]
    %v790 = vld [vmem:[%s785 + $0x20] sm:$0xff]
    %v791 = vld [vmem:[%s785 + $0x28] sm:$0xff]
    %v792 = vld [vmem:[%s785 + $0x30] sm:$0xff]
    %v793 = vld [vmem:[%s785 + $0x38] sm:$0xff]
    %v794 = vld [vmem:[%s785 + $0x40] sm:$0xff]
    %v795 = vld [vmem:[%s785 + $0x48] sm:$0xff]
    %v796 = vld [vmem:[%s785 + $0x50] sm:$0xff]
    %v797 = vld [vmem:[%s785 + $0x58] sm:$0xff]
    %v798 = vld [vmem:[%s785 + $0x60] sm:$0xff]
    %v799 = vld [vmem:[%s785 + $0x68] sm:$0xff]
    %v800 = vld [vmem:[%s785 + $0x70] sm:$0xff]
    %v801 = vld [vmem:[%s785 + $0x78] sm:$0xff]
    %v802 = vld [vmem:[%s785 + $0x80] sm:$0xff]
    %v803 = vld [vmem:[%s785 + $0x88] sm:$0xff]
    %v804 = vld [vmem:[%s785 + $0x90] sm:$0xff]
    %v805 = vld [vmem:[%s785 + $0x98] sm:$0xff]
    %v806 = vld [vmem:[%s785 + $0xa0] sm:$0xff]
    %v807 = vld [vmem:[%s785 + $0xa8] sm:$0xff]
    %v808 = vld [vmem:[%s785 + $0xb0] sm:$0xff]
    %v809 = vld [vmem:[%s785 + $0xb8] sm:$0xff]
    %v810 = vld [vmem:[%s785 + $0xc0] sm:$0xff]
    %v811 = vld [vmem:[%s785 + $0xc8] sm:$0xff]
    %v812 = vld [vmem:[%s785 + $0xd0] sm:$0xff]
    %v813 = vld [vmem:[%s785 + $0xd8] sm:$0xff]
    %v814 = vld [vmem:[%s785 + $0xe0] sm:$0xff]
    %v815 = vld [vmem:[%s785 + $0xe8] sm:$0xff]
    %v816 = vld [vmem:[%s785 + $0xf0] sm:$0xff]
    %v817 = vld [vmem:[%s785 + $0xf8] sm:$0xff]
    %v818 = vld [vmem:[%s785 + $0x100] sm:$0xff]
    %v819 = vld [vmem:[%s785 + $0x108] sm:$0xff]
    %v820 = vld [vmem:[%s785 + $0x110] sm:$0xff]
    %v821 = vld [vmem:[%s785 + $0x118] sm:$0xff]
    %v822 = vld [vmem:[%s785 + $0x120] sm:$0xff]
    %v823 = vld [vmem:[%s785 + $0x128] sm:$0xff]
    %v824 = vld [vmem:[%s785 + $0x130] sm:$0xff]
    %v825 = vld [vmem:[%s785 + $0x138] sm:$0xff]
    %v826 = vld [vmem:[%s785 + $0x140] sm:$0xff]
    %v827 = vld [vmem:[%s785 + $0x148] sm:$0xff]
    %v828 = vld [vmem:[%s785 + $0x150] sm:$0xff]
    %v829 = vld [vmem:[%s785 + $0x158] sm:$0xff]
    %v830 = vld [vmem:[%s785 + $0x160] sm:$0xff]
    %v831 = vld [vmem:[%s785 + $0x168] sm:$0xff]
    %v832 = vld [vmem:[%s785 + $0x170] sm:$0xff]
    %v833 = vld [vmem:[%s785 + $0x178] sm:$0xff]
    %v834 = vld [vmem:[%s785 + $0x180] sm:$0xff]
    %v835 = vld [vmem:[%s785 + $0x188] sm:$0xff]
    %v836 = vld [vmem:[%s785 + $0x190] sm:$0xff]
    %v837 = vld [vmem:[%s785 + $0x198] sm:$0xff]
    %v838 = vld [vmem:[%s785 + $0x1a0] sm:$0xff]
    %v839 = vld [vmem:[%s785 + $0x1a8] sm:$0xff]
    %v840 = vld [vmem:[%s785 + $0x1b0] sm:$0xff]
    %v841 = vld [vmem:[%s785 + $0x1b8] sm:$0xff]
    %v842 = vld [vmem:[%s785 + $0x1c0] sm:$0xff]
    %v843 = vld [vmem:[%s785 + $0x1c8] sm:$0xff]
    %v844 = vld [vmem:[%s785 + $0x1d0] sm:$0xff]
    %v845 = vld [vmem:[%s785 + $0x1d8] sm:$0xff]
    %v846 = vld [vmem:[%s785 + $0x1e0] sm:$0xff]
    %v847 = vld [vmem:[%s785 + $0x1e8] sm:$0xff]
    %v848 = vld [vmem:[%s785 + $0x1f0] sm:$0xff]
    %v849 = vld [vmem:[%s785 + $0x1f8] sm:$0xff]
    %v914 = vunpack.c.l.b16 %v786
    %v915 = vunpack.c.h.b16 %v786
    %v916 = vunpack.c.l.b16 %v787
    %v917 = vunpack.c.h.b16 %v787
    %v918 = vunpack.c.l.b16 %v788
    %v919 = vunpack.c.h.b16 %v788
    %v920 = vunpack.c.l.b16 %v789
    %v921 = vunpack.c.h.b16 %v789
    %v922 = vunpack.c.l.b16 %v790
    %v923 = vunpack.c.h.b16 %v790
    %v924 = vunpack.c.l.b16 %v791
    %v925 = vunpack.c.h.b16 %v791
    %v926 = vunpack.c.l.b16 %v792
    %v927 = vunpack.c.h.b16 %v792
    %v928 = vunpack.c.l.b16 %v793
    %v929 = vunpack.c.h.b16 %v793
    %v930 = vunpack.c.l.b16 %v794
    %v931 = vunpack.c.h.b16 %v794
    %v932 = vunpack.c.l.b16 %v795
    %v933 = vunpack.c.h.b16 %v795
    %v934 = vunpack.c.l.b16 %v796
    %v935 = vunpack.c.h.b16 %v796
    %v936 = vunpack.c.l.b16 %v797
    %v937 = vunpack.c.h.b16 %v797
    %v938 = vunpack.c.l.b16 %v798
    %v939 = vunpack.c.h.b16 %v798
    %v940 = vunpack.c.l.b16 %v799
    %v941 = vunpack.c.h.b16 %v799
    %v942 = vunpack.c.l.b16 %v800
    %v943 = vunpack.c.h.b16 %v800
    %v944 = vunpack.c.l.b16 %v801
    %v945 = vunpack.c.h.b16 %v801
    %v946 = vunpack.c.l.b16 %v802
    %v947 = vunpack.c.h.b16 %v802
    %v948 = vunpack.c.l.b16 %v803
    %v949 = vunpack.c.h.b16 %v803
    %v950 = vunpack.c.l.b16 %v804
    %v951 = vunpack.c.h.b16 %v804
    %v952 = vunpack.c.l.b16 %v805
    %v953 = vunpack.c.h.b16 %v805
    %v954 = vunpack.c.l.b16 %v806
    %v955 = vunpack.c.h.b16 %v806
    %v956 = vunpack.c.l.b16 %v807
    %v957 = vunpack.c.h.b16 %v807
    %v958 = vunpack.c.l.b16 %v808
    %v959 = vunpack.c.h.b16 %v808
    %v960 = vunpack.c.l.b16 %v809
    %v961 = vunpack.c.h.b16 %v809
    %v962 = vunpack.c.l.b16 %v810
    %v963 = vunpack.c.h.b16 %v810
    %v964 = vunpack.c.l.b16 %v811
    %v965 = vunpack.c.h.b16 %v811
    %v966 = vunpack.c.l.b16 %v812
    %v967 = vunpack.c.h.b16 %v812
    %v968 = vunpack.c.l.b16 %v813
    %v969 = vunpack.c.h.b16 %v813
    %v970 = vunpack.c.l.b16 %v814
    %v971 = vunpack.c.h.b16 %v814
    %v972 = vunpack.c.l.b16 %v815
    %v973 = vunpack.c.h.b16 %v815
    %v974 = vunpack.c.l.b16 %v816
    %v975 = vunpack.c.h.b16 %v816
    %v976 = vunpack.c.l.b16 %v817
    %v977 = vunpack.c.h.b16 %v817
    %v978 = vunpack.c.l.b16 %v818
    %v979 = vunpack.c.h.b16 %v818
    %v980 = vunpack.c.l.b16 %v819
    %v981 = vunpack.c.h.b16 %v819
    %v982 = vunpack.c.l.b16 %v820
    %v983 = vunpack.c.h.b16 %v820
    %v984 = vunpack.c.l.b16 %v821
    %v985 = vunpack.c.h.b16 %v821
    %v986 = vunpack.c.l.b16 %v822
    %v987 = vunpack.c.h.b16 %v822
    %v988 = vunpack.c.l.b16 %v823
    %v989 = vunpack.c.h.b16 %v823
    %v990 = vunpack.c.l.b16 %v824
    %v991 = vunpack.c.h.b16 %v824
    %v992 = vunpack.c.l.b16 %v825
    %v993 = vunpack.c.h.b16 %v825
    %v994 = vunpack.c.l.b16 %v826
    %v995 = vunpack.c.h.b16 %v826
    %v996 = vunpack.c.l.b16 %v827
    %v997 = vunpack.c.h.b16 %v827
    %v998 = vunpack.c.l.b16 %v828
    %v999 = vunpack.c.h.b16 %v828
    %v1000 = vunpack.c.l.b16 %v829
    %v1001 = vunpack.c.h.b16 %v829
    %v1002 = vunpack.c.l.b16 %v830
    %v1003 = vunpack.c.h.b16 %v830
    %v1004 = vunpack.c.l.b16 %v831
    %v1005 = vunpack.c.h.b16 %v831
    %v1006 = vunpack.c.l.b16 %v832
    %v1007 = vunpack.c.h.b16 %v832
    %v1008 = vunpack.c.l.b16 %v833
    %v1009 = vunpack.c.h.b16 %v833
    %v1010 = vunpack.c.l.b16 %v834
    %v1011 = vunpack.c.h.b16 %v834
    %v1012 = vunpack.c.l.b16 %v835
    %v1013 = vunpack.c.h.b16 %v835
    %v1014 = vunpack.c.l.b16 %v836
    %v1015 = vunpack.c.h.b16 %v836
    %v1016 = vunpack.c.l.b16 %v837
    %v1017 = vunpack.c.h.b16 %v837
    %v1018 = vunpack.c.l.b16 %v838
    %v1019 = vunpack.c.h.b16 %v838
    %v1020 = vunpack.c.l.b16 %v839
    %v1021 = vunpack.c.h.b16 %v839
    %v1022 = vunpack.c.l.b16 %v840
    %v1023 = vunpack.c.h.b16 %v840
    %v1024 = vunpack.c.l.b16 %v841
    %v1025 = vunpack.c.h.b16 %v841
    %v1026 = vunpack.c.l.b16 %v842
    %v1027 = vunpack.c.h.b16 %v842
    %v1028 = vunpack.c.l.b16 %v843
    %v1029 = vunpack.c.h.b16 %v843
    %v1030 = vunpack.c.l.b16 %v844
    %v1031 = vunpack.c.h.b16 %v844
    %v1032 = vunpack.c.l.b16 %v845
    %v1033 = vunpack.c.h.b16 %v845
    %v1034 = vunpack.c.l.b16 %v846
    %v1035 = vunpack.c.h.b16 %v846
    %v1036 = vunpack.c.l.b16 %v847
    %v1037 = vunpack.c.h.b16 %v847
    %v1038 = vunpack.c.l.b16 %v848
    %v1039 = vunpack.c.h.b16 %v848
    %v1040 = vunpack.c.l.b16 %v849
    %v1041 = vunpack.c.h.b16 %v849
    %v1042 = vpack.c.b16 %v918, %v914
    %v1043 = vpack.c.b16 %v919, %v915
    %v1044 = vpack.c.b16 %v920, %v916
    %v1045 = vpack.c.b16 %v921, %v917
    %v1046 = vpack.c.b16 %v926, %v922
    %v1047 = vpack.c.b16 %v927, %v923
    %v1048 = vpack.c.b16 %v928, %v924
    %v1049 = vpack.c.b16 %v929, %v925
    %v1050 = vpack.c.b16 %v934, %v930
    %v1051 = vpack.c.b16 %v935, %v931
    %v1052 = vpack.c.b16 %v936, %v932
    %v1053 = vpack.c.b16 %v937, %v933
    %v1054 = vpack.c.b16 %v942, %v938
    %v1055 = vpack.c.b16 %v943, %v939
    %v1056 = vpack.c.b16 %v944, %v940
    %v1057 = vpack.c.b16 %v945, %v941
    %v1058 = vpack.c.b16 %v950, %v946
    %v1059 = vpack.c.b16 %v951, %v947
    %v1060 = vpack.c.b16 %v952, %v948
    %v1061 = vpack.c.b16 %v953, %v949
    %v1062 = vpack.c.b16 %v958, %v954
    %v1063 = vpack.c.b16 %v959, %v955
    %v1064 = vpack.c.b16 %v960, %v956
    %v1065 = vpack.c.b16 %v961, %v957
    %v1066 = vpack.c.b16 %v966, %v962
    %v1067 = vpack.c.b16 %v967, %v963
    %v1068 = vpack.c.b16 %v968, %v964
    %v1069 = vpack.c.b16 %v969, %v965
    %v1070 = vpack.c.b16 %v974, %v970
    %v1071 = vpack.c.b16 %v975, %v971
    %v1072 = vpack.c.b16 %v976, %v972
    %v1073 = vpack.c.b16 %v977, %v973
    %v1074 = vpack.c.b16 %v982, %v978
    %v1075 = vpack.c.b16 %v983, %v979
    %v1076 = vpack.c.b16 %v984, %v980
    %v1077 = vpack.c.b16 %v985, %v981
    %v1078 = vpack.c.b16 %v990, %v986
    %v1079 = vpack.c.b16 %v991, %v987
    %v1080 = vpack.c.b16 %v992, %v988
    %v1081 = vpack.c.b16 %v993, %v989
    %v1082 = vpack.c.b16 %v998, %v994
    %v1083 = vpack.c.b16 %v999, %v995
    %v1084 = vpack.c.b16 %v1000, %v996
    %v1085 = vpack.c.b16 %v1001, %v997
    %v1086 = vpack.c.b16 %v1006, %v1002
    %v1087 = vpack.c.b16 %v1007, %v1003
    %v1088 = vpack.c.b16 %v1008, %v1004
    %v1089 = vpack.c.b16 %v1009, %v1005
    %v1090 = vpack.c.b16 %v1014, %v1010
    %v1091 = vpack.c.b16 %v1015, %v1011
    %v1092 = vpack.c.b16 %v1016, %v1012
    %v1093 = vpack.c.b16 %v1017, %v1013
    %v1094 = vpack.c.b16 %v1022, %v1018
    %v1095 = vpack.c.b16 %v1023, %v1019
    %v1096 = vpack.c.b16 %v1024, %v1020
    %v1097 = vpack.c.b16 %v1025, %v1021
    %v1098 = vpack.c.b16 %v1030, %v1026
    %v1099 = vpack.c.b16 %v1031, %v1027
    %v1100 = vpack.c.b16 %v1032, %v1028
    %v1101 = vpack.c.b16 %v1033, %v1029
    %v1102 = vpack.c.b16 %v1038, %v1034
    %v1103 = vpack.c.b16 %v1039, %v1035
    %v1104 = vpack.c.b16 %v1040, %v1036
    %v1105 = vpack.c.b16 %v1041, %v1037
    %1170 = vmatprep.subr.bf16.mxu0 %v1071
    %1171 = vmatpush1.bf16.msra.mxu0 %v1070
    %1172 = vmatprep.subr.bf16.mxu0 %v1067
    %1173 = vmatpush1.bf16.msra.mxu0 %v1066
    %1174 = vmatprep.subr.bf16.mxu0 %v1063
    %1175 = vmatpush1.bf16.msra.mxu0 %v1062
    %1176 = vmatprep.subr.bf16.mxu0 %v1059
    %1177 = vmatpush1.bf16.msra.mxu0 %v1058
    %1178 = vmatprep.subr.bf16.mxu0 %v1055
    %1179 = vmatpush1.bf16.msra.mxu0 %v1054
    %1180 = vmatprep.subr.bf16.mxu0 %v1051
    %1181 = vmatpush1.bf16.msra.mxu0 %v1050
    %1182 = vmatprep.subr.bf16.mxu0 %v1047
    %1183 = vmatpush1.bf16.msra.mxu0 %v1046
    %1184 = vmatprep.subr.bf16.mxu0 %v1043
    %1185 = vmatpush1.bf16.msra.mxu0 %v1042
    %1186 = vmatprep.subr.bf16.mxu0 %v1103
    %1187 = vmatpush2.bf16.msra.mxu0 %v1102
    %1188 = vmatprep.subr.bf16.mxu0 %v1099
    %1189 = vmatpush2.bf16.msra.mxu0 %v1098
    %1190 = vmatprep.subr.bf16.mxu0 %v1095
    %1191 = vmatpush2.bf16.msra.mxu0 %v1094
    %1192 = vmatprep.subr.bf16.mxu0 %v1091
    %1193 = vmatpush2.bf16.msra.mxu0 %v1090
    %1194 = vmatprep.subr.bf16.mxu0 %v1087
    %1195 = vmatpush2.bf16.msra.mxu0 %v1086
    %1196 = vmatprep.subr.bf16.mxu0 %v1083
    %1197 = vmatpush2.bf16.msra.mxu0 %v1082
    %1198 = vmatprep.subr.bf16.mxu0 %v1079
    %1199 = vmatpush2.bf16.msra.mxu0 %v1078
    %1200 = vmatprep.subr.bf16.mxu0 %v1075
    %1201 = vmatpush2.bf16.msra.mxu0 %v1074
    %1202 = vmatprep.mubr.bf16.mxu0 %v784
    %1203 = vmatmul.mubr.bf16.gmra.mxu0 %v783
    %v1204 = vpop.f32.mrf.mxu0
    %v1205 = vadd.f32 0.0, %v1204
    %v1206 = vpop.f32.mrf.mxu0
    %v1207 = vadd.f32 0.0, %v1206
    %v1208 = vpop.f32.mrf.mxu0
    %v1209 = vpop.f32.mrf.mxu0
    %1210 = vdwg.mxu0
    %1211 = vmatprep.subr.bf16.mxu0 %v1073
    %1212 = vmatpush1.bf16.msra.mxu0 %v1072
    %1213 = vmatprep.subr.bf16.mxu0 %v1069
    %1214 = vmatpush1.bf16.msra.mxu0 %v1068
    %1215 = vmatprep.subr.bf16.mxu0 %v1065
    %1216 = vmatpush1.bf16.msra.mxu0 %v1064
    %1217 = vmatprep.subr.bf16.mxu0 %v1061
    %1218 = vmatpush1.bf16.msra.mxu0 %v1060
    %1219 = vmatprep.subr.bf16.mxu0 %v1057
    %1220 = vmatpush1.bf16.msra.mxu0 %v1056
    %1221 = vmatprep.subr.bf16.mxu0 %v1053
    %1222 = vmatpush1.bf16.msra.mxu0 %v1052
    %1223 = vmatprep.subr.bf16.mxu0 %v1049
    %1224 = vmatpush1.bf16.msra.mxu0 %v1048
    %1225 = vmatprep.subr.bf16.mxu0 %v1045
    %1226 = vmatpush1.bf16.msra.mxu0 %v1044
    %1227 = vmatprep.subr.bf16.mxu0 %v1105
    %1228 = vmatpush2.bf16.msra.mxu0 %v1104
    %1229 = vmatprep.subr.bf16.mxu0 %v1101
    %1230 = vmatpush2.bf16.msra.mxu0 %v1100
    %1231 = vmatprep.subr.bf16.mxu0 %v1097
    %1232 = vmatpush2.bf16.msra.mxu0 %v1096
    %1233 = vmatprep.subr.bf16.mxu0 %v1093
    %1234 = vmatpush2.bf16.msra.mxu0 %v1092
    %1235 = vmatprep.subr.bf16.mxu0 %v1089
    %1236 = vmatpush2.bf16.msra.mxu0 %v1088
    %1237 = vmatprep.subr.bf16.mxu0 %v1085
    %1238 = vmatpush2.bf16.msra.mxu0 %v1084
    %1239 = vmatprep.subr.bf16.mxu0 %v1081
    %1240 = vmatpush2.bf16.msra.mxu0 %v1080
    %1241 = vmatprep.subr.bf16.mxu0 %v1077
    %1242 = vmatpush2.bf16.msra.mxu0 %v1076
    %1243 = vmatprep.mubr.bf16.mxu0 %v784
    %1244 = vmatmul.mubr.bf16.gmra.mxu0 %v783
    %v1245 = vpop.f32.mrf.mxu0
    %v1246 = vadd.f32 0.0, %v1245
    %v1247 = vpop.f32.mrf.mxu0
    %v1248 = vadd.f32 0.0, %v1247
    %v1249 = vpop.f32.mrf.mxu0
    %v1250 = vpop.f32.mrf.mxu0
    %1251 = vdwg.mxu0
    %v1252 = vmul.f32 %v1205, %v1246
    %v1253 = vmul.f32 %v1207, %v1248
    %v1254 = vpack.c.bf16 %v1252, %v1252
    %v1255 = vpack.c.bf16 %v1253, %v1253
    %s1256 = scalar_lea.vmem [#allocation7], 1024
    %v1257 = vld [vmem:[%s1256] sm:$0xff]
    %v1258 = vld [vmem:[%s1256 + $0x8] sm:$0xff]
    %v1259 = vld [vmem:[%s1256 + $0x10] sm:$0xff]
    %v1260 = vld [vmem:[%s1256 + $0x18] sm:$0xff]
    %v1261 = vld [vmem:[%s1256 + $0x20] sm:$0xff]
    %v1262 = vld [vmem:[%s1256 + $0x28] sm:$0xff]
    %v1263 = vld [vmem:[%s1256 + $0x30] sm:$0xff]
    %v1264 = vld [vmem:[%s1256 + $0x38] sm:$0xff]
    %v1265 = vld [vmem:[%s1256 + $0x40] sm:$0xff]
    %v1266 = vld [vmem:[%s1256 + $0x48] sm:$0xff]
    %v1267 = vld [vmem:[%s1256 + $0x50] sm:$0xff]
    %v1268 = vld [vmem:[%s1256 + $0x58] sm:$0xff]
    %v1269 = vld [vmem:[%s1256 + $0x60] sm:$0xff]
    %v1270 = vld [vmem:[%s1256 + $0x68] sm:$0xff]
    %v1271 = vld [vmem:[%s1256 + $0x70] sm:$0xff]
    %v1272 = vld [vmem:[%s1256 + $0x78] sm:$0xff]
    %v1273 = vld [vmem:[%s1256 + $0x80] sm:$0xff]
    %v1274 = vld [vmem:[%s1256 + $0x88] sm:$0xff]
    %v1275 = vld [vmem:[%s1256 + $0x90] sm:$0xff]
    %v1276 = vld [vmem:[%s1256 + $0x98] sm:$0xff]
    %v1277 = vld [vmem:[%s1256 + $0xa0] sm:$0xff]
    %v1278 = vld [vmem:[%s1256 + $0xa8] sm:$0xff]
    %v1279 = vld [vmem:[%s1256 + $0xb0] sm:$0xff]
    %v1280 = vld [vmem:[%s1256 + $0xb8] sm:$0xff]
    %v1281 = vld [vmem:[%s1256 + $0xc0] sm:$0xff]
    %v1282 = vld [vmem:[%s1256 + $0xc8] sm:$0xff]
    %v1283 = vld [vmem:[%s1256 + $0xd0] sm:$0xff]
    %v1284 = vld [vmem:[%s1256 + $0xd8] sm:$0xff]
    %v1285 = vld [vmem:[%s1256 + $0xe0] sm:$0xff]
    %v1286 = vld [vmem:[%s1256 + $0xe8] sm:$0xff]
    %v1287 = vld [vmem:[%s1256 + $0xf0] sm:$0xff]
    %v1288 = vld [vmem:[%s1256 + $0xf8] sm:$0xff]
    %v1289 = vld [vmem:[%s1256 + $0x100] sm:$0xff]
    %v1290 = vld [vmem:[%s1256 + $0x108] sm:$0xff]
    %v1291 = vld [vmem:[%s1256 + $0x110] sm:$0xff]
    %v1292 = vld [vmem:[%s1256 + $0x118] sm:$0xff]
    %v1293 = vld [vmem:[%s1256 + $0x120] sm:$0xff]
    %v1294 = vld [vmem:[%s1256 + $0x128] sm:$0xff]
    %v1295 = vld [vmem:[%s1256 + $0x130] sm:$0xff]
    %v1296 = vld [vmem:[%s1256 + $0x138] sm:$0xff]
    %v1297 = vld [vmem:[%s1256 + $0x140] sm:$0xff]
    %v1298 = vld [vmem:[%s1256 + $0x148] sm:$0xff]
    %v1299 = vld [vmem:[%s1256 + $0x150] sm:$0xff]
    %v1300 = vld [vmem:[%s1256 + $0x158] sm:$0xff]
    %v1301 = vld [vmem:[%s1256 + $0x160] sm:$0xff]
    %v1302 = vld [vmem:[%s1256 + $0x168] sm:$0xff]
    %v1303 = vld [vmem:[%s1256 + $0x170] sm:$0xff]
    %v1304 = vld [vmem:[%s1256 + $0x178] sm:$0xff]
    %v1305 = vld [vmem:[%s1256 + $0x180] sm:$0xff]
    %v1306 = vld [vmem:[%s1256 + $0x188] sm:$0xff]
    %v1307 = vld [vmem:[%s1256 + $0x190] sm:$0xff]
    %v1308 = vld [vmem:[%s1256 + $0x198] sm:$0xff]
    %v1309 = vld [vmem:[%s1256 + $0x1a0] sm:$0xff]
    %v1310 = vld [vmem:[%s1256 + $0x1a8] sm:$0xff]
    %v1311 = vld [vmem:[%s1256 + $0x1b0] sm:$0xff]
    %v1312 = vld [vmem:[%s1256 + $0x1b8] sm:$0xff]
    %v1313 = vld [vmem:[%s1256 + $0x1c0] sm:$0xff]
    %v1314 = vld [vmem:[%s1256 + $0x1c8] sm:$0xff]
    %v1315 = vld [vmem:[%s1256 + $0x1d0] sm:$0xff]
    %v1316 = vld [vmem:[%s1256 + $0x1d8] sm:$0xff]
    %v1317 = vld [vmem:[%s1256 + $0x1e0] sm:$0xff]
    %v1318 = vld [vmem:[%s1256 + $0x1e8] sm:$0xff]
    %v1319 = vld [vmem:[%s1256 + $0x1f0] sm:$0xff]
    %v1320 = vld [vmem:[%s1256 + $0x1f8] sm:$0xff]
    %v1385 = vunpack.c.l.b16 %v1257
    %v1386 = vunpack.c.h.b16 %v1257
    %v1387 = vunpack.c.l.b16 %v1258
    %v1388 = vunpack.c.h.b16 %v1258
    %v1389 = vunpack.c.l.b16 %v1259
    %v1390 = vunpack.c.h.b16 %v1259
    %v1391 = vunpack.c.l.b16 %v1260
    %v1392 = vunpack.c.h.b16 %v1260
    %v1393 = vunpack.c.l.b16 %v1261
    %v1394 = vunpack.c.h.b16 %v1261
    %v1395 = vunpack.c.l.b16 %v1262
    %v1396 = vunpack.c.h.b16 %v1262
    %v1397 = vunpack.c.l.b16 %v1263
    %v1398 = vunpack.c.h.b16 %v1263
    %v1399 = vunpack.c.l.b16 %v1264
    %v1400 = vunpack.c.h.b16 %v1264
    %v1401 = vunpack.c.l.b16 %v1265
    %v1402 = vunpack.c.h.b16 %v1265
    %v1403 = vunpack.c.l.b16 %v1266
    %v1404 = vunpack.c.h.b16 %v1266
    %v1405 = vunpack.c.l.b16 %v1267
    %v1406 = vunpack.c.h.b16 %v1267
    %v1407 = vunpack.c.l.b16 %v1268
    %v1408 = vunpack.c.h.b16 %v1268
    %v1409 = vunpack.c.l.b16 %v1269
    %v1410 = vunpack.c.h.b16 %v1269
    %v1411 = vunpack.c.l.b16 %v1270
    %v1412 = vunpack.c.h.b16 %v1270
    %v1413 = vunpack.c.l.b16 %v1271
    %v1414 = vunpack.c.h.b16 %v1271
    %v1415 = vunpack.c.l.b16 %v1272
    %v1416 = vunpack.c.h.b16 %v1272
    %v1417 = vunpack.c.l.b16 %v1273
    %v1418 = vunpack.c.h.b16 %v1273
    %v1419 = vunpack.c.l.b16 %v1274
    %v1420 = vunpack.c.h.b16 %v1274
    %v1421 = vunpack.c.l.b16 %v1275
    %v1422 = vunpack.c.h.b16 %v1275
    %v1423 = vunpack.c.l.b16 %v1276
    %v1424 = vunpack.c.h.b16 %v1276
    %v1425 = vunpack.c.l.b16 %v1277
    %v1426 = vunpack.c.h.b16 %v1277
    %v1427 = vunpack.c.l.b16 %v1278
    %v1428 = vunpack.c.h.b16 %v1278
    %v1429 = vunpack.c.l.b16 %v1279
    %v1430 = vunpack.c.h.b16 %v1279
    %v1431 = vunpack.c.l.b16 %v1280
    %v1432 = vunpack.c.h.b16 %v1280
    %v1433 = vunpack.c.l.b16 %v1281
    %v1434 = vunpack.c.h.b16 %v1281
    %v1435 = vunpack.c.l.b16 %v1282
    %v1436 = vunpack.c.h.b16 %v1282
    %v1437 = vunpack.c.l.b16 %v1283
    %v1438 = vunpack.c.h.b16 %v1283
    %v1439 = vunpack.c.l.b16 %v1284
    %v1440 = vunpack.c.h.b16 %v1284
    %v1441 = vunpack.c.l.b16 %v1285
    %v1442 = vunpack.c.h.b16 %v1285
    %v1443 = vunpack.c.l.b16 %v1286
    %v1444 = vunpack.c.h.b16 %v1286
    %v1445 = vunpack.c.l.b16 %v1287
    %v1446 = vunpack.c.h.b16 %v1287
    %v1447 = vunpack.c.l.b16 %v1288
    %v1448 = vunpack.c.h.b16 %v1288
    %v1449 = vunpack.c.l.b16 %v1289
    %v1450 = vunpack.c.h.b16 %v1289
    %v1451 = vunpack.c.l.b16 %v1290
    %v1452 = vunpack.c.h.b16 %v1290
    %v1453 = vunpack.c.l.b16 %v1291
    %v1454 = vunpack.c.h.b16 %v1291
    %v1455 = vunpack.c.l.b16 %v1292
    %v1456 = vunpack.c.h.b16 %v1292
    %v1457 = vunpack.c.l.b16 %v1293
    %v1458 = vunpack.c.h.b16 %v1293
    %v1459 = vunpack.c.l.b16 %v1294
    %v1460 = vunpack.c.h.b16 %v1294
    %v1461 = vunpack.c.l.b16 %v1295
    %v1462 = vunpack.c.h.b16 %v1295
    %v1463 = vunpack.c.l.b16 %v1296
    %v1464 = vunpack.c.h.b16 %v1296
    %v1465 = vunpack.c.l.b16 %v1297
    %v1466 = vunpack.c.h.b16 %v1297
    %v1467 = vunpack.c.l.b16 %v1298
    %v1468 = vunpack.c.h.b16 %v1298
    %v1469 = vunpack.c.l.b16 %v1299
    %v1470 = vunpack.c.h.b16 %v1299
    %v1471 = vunpack.c.l.b16 %v1300
    %v1472 = vunpack.c.h.b16 %v1300
    %v1473 = vunpack.c.l.b16 %v1301
    %v1474 = vunpack.c.h.b16 %v1301
    %v1475 = vunpack.c.l.b16 %v1302
    %v1476 = vunpack.c.h.b16 %v1302
    %v1477 = vunpack.c.l.b16 %v1303
    %v1478 = vunpack.c.h.b16 %v1303
    %v1479 = vunpack.c.l.b16 %v1304
    %v1480 = vunpack.c.h.b16 %v1304
    %v1481 = vunpack.c.l.b16 %v1305
    %v1482 = vunpack.c.h.b16 %v1305
    %v1483 = vunpack.c.l.b16 %v1306
    %v1484 = vunpack.c.h.b16 %v1306
    %v1485 = vunpack.c.l.b16 %v1307
    %v1486 = vunpack.c.h.b16 %v1307
    %v1487 = vunpack.c.l.b16 %v1308
    %v1488 = vunpack.c.h.b16 %v1308
    %v1489 = vunpack.c.l.b16 %v1309
    %v1490 = vunpack.c.h.b16 %v1309
    %v1491 = vunpack.c.l.b16 %v1310
    %v1492 = vunpack.c.h.b16 %v1310
    %v1493 = vunpack.c.l.b16 %v1311
    %v1494 = vunpack.c.h.b16 %v1311
    %v1495 = vunpack.c.l.b16 %v1312
    %v1496 = vunpack.c.h.b16 %v1312
    %v1497 = vunpack.c.l.b16 %v1313
    %v1498 = vunpack.c.h.b16 %v1313
    %v1499 = vunpack.c.l.b16 %v1314
    %v1500 = vunpack.c.h.b16 %v1314
    %v1501 = vunpack.c.l.b16 %v1315
    %v1502 = vunpack.c.h.b16 %v1315
    %v1503 = vunpack.c.l.b16 %v1316
    %v1504 = vunpack.c.h.b16 %v1316
    %v1505 = vunpack.c.l.b16 %v1317
    %v1506 = vunpack.c.h.b16 %v1317
    %v1507 = vunpack.c.l.b16 %v1318
    %v1508 = vunpack.c.h.b16 %v1318
    %v1509 = vunpack.c.l.b16 %v1319
    %v1510 = vunpack.c.h.b16 %v1319
    %v1511 = vunpack.c.l.b16 %v1320
    %v1512 = vunpack.c.h.b16 %v1320
    %v1513 = vpack.c.b16 %v1389, %v1385
    %v1514 = vpack.c.b16 %v1390, %v1386
    %v1515 = vpack.c.b16 %v1391, %v1387
    %v1516 = vpack.c.b16 %v1392, %v1388
    %v1517 = vpack.c.b16 %v1397, %v1393
    %v1518 = vpack.c.b16 %v1398, %v1394
    %v1519 = vpack.c.b16 %v1399, %v1395
    %v1520 = vpack.c.b16 %v1400, %v1396
    %v1521 = vpack.c.b16 %v1405, %v1401
    %v1522 = vpack.c.b16 %v1406, %v1402
    %v1523 = vpack.c.b16 %v1407, %v1403
    %v1524 = vpack.c.b16 %v1408, %v1404
    %v1525 = vpack.c.b16 %v1413, %v1409
    %v1526 = vpack.c.b16 %v1414, %v1410
    %v1527 = vpack.c.b16 %v1415, %v1411
    %v1528 = vpack.c.b16 %v1416, %v1412
    %v1529 = vpack.c.b16 %v1421, %v1417
    %v1530 = vpack.c.b16 %v1422, %v1418
    %v1531 = vpack.c.b16 %v1423, %v1419
    %v1532 = vpack.c.b16 %v1424, %v1420
    %v1533 = vpack.c.b16 %v1429, %v1425
    %v1534 = vpack.c.b16 %v1430, %v1426
    %v1535 = vpack.c.b16 %v1431, %v1427
    %v1536 = vpack.c.b16 %v1432, %v1428
    %v1537 = vpack.c.b16 %v1437, %v1433
    %v1538 = vpack.c.b16 %v1438, %v1434
    %v1539 = vpack.c.b16 %v1439, %v1435
    %v1540 = vpack.c.b16 %v1440, %v1436
    %v1541 = vpack.c.b16 %v1445, %v1441
    %v1542 = vpack.c.b16 %v1446, %v1442
    %v1543 = vpack.c.b16 %v1447, %v1443
    %v1544 = vpack.c.b16 %v1448, %v1444
    %v1545 = vpack.c.b16 %v1453, %v1449
    %v1546 = vpack.c.b16 %v1454, %v1450
    %v1547 = vpack.c.b16 %v1455, %v1451
    %v1548 = vpack.c.b16 %v1456, %v1452
    %v1549 = vpack.c.b16 %v1461, %v1457
    %v1550 = vpack.c.b16 %v1462, %v1458
    %v1551 = vpack.c.b16 %v1463, %v1459
    %v1552 = vpack.c.b16 %v1464, %v1460
    %v1553 = vpack.c.b16 %v1469, %v1465
    %v1554 = vpack.c.b16 %v1470, %v1466
    %v1555 = vpack.c.b16 %v1471, %v1467
    %v1556 = vpack.c.b16 %v1472, %v1468
    %v1557 = vpack.c.b16 %v1477, %v1473
    %v1558 = vpack.c.b16 %v1478, %v1474
    %v1559 = vpack.c.b16 %v1479, %v1475
    %v1560 = vpack.c.b16 %v1480, %v1476
    %v1561 = vpack.c.b16 %v1485, %v1481
    %v1562 = vpack.c.b16 %v1486, %v1482
    %v1563 = vpack.c.b16 %v1487, %v1483
    %v1564 = vpack.c.b16 %v1488, %v1484
    %v1565 = vpack.c.b16 %v1493, %v1489
    %v1566 = vpack.c.b16 %v1494, %v1490
    %v1567 = vpack.c.b16 %v1495, %v1491
    %v1568 = vpack.c.b16 %v1496, %v1492
    %v1569 = vpack.c.b16 %v1501, %v1497
    %v1570 = vpack.c.b16 %v1502, %v1498
    %v1571 = vpack.c.b16 %v1503, %v1499
    %v1572 = vpack.c.b16 %v1504, %v1500
    %v1573 = vpack.c.b16 %v1509, %v1505
    %v1574 = vpack.c.b16 %v1510, %v1506
    %v1575 = vpack.c.b16 %v1511, %v1507
    %v1576 = vpack.c.b16 %v1512, %v1508
    %1641 = vmatprep.subr.bf16.mxu0 %v1542
    %1642 = vmatpush1.bf16.msra.mxu0 %v1541
    %1643 = vmatprep.subr.bf16.mxu0 %v1538
    %1644 = vmatpush1.bf16.msra.mxu0 %v1537
    %1645 = vmatprep.subr.bf16.mxu0 %v1534
    %1646 = vmatpush1.bf16.msra.mxu0 %v1533
    %1647 = vmatprep.subr.bf16.mxu0 %v1530
    %1648 = vmatpush1.bf16.msra.mxu0 %v1529
    %1649 = vmatprep.subr.bf16.mxu0 %v1526
    %1650 = vmatpush1.bf16.msra.mxu0 %v1525
    %1651 = vmatprep.subr.bf16.mxu0 %v1522
    %1652 = vmatpush1.bf16.msra.mxu0 %v1521
    %1653 = vmatprep.subr.bf16.mxu0 %v1518
    %1654 = vmatpush1.bf16.msra.mxu0 %v1517
    %1655 = vmatprep.subr.bf16.mxu0 %v1514
    %1656 = vmatpush1.bf16.msra.mxu0 %v1513
    %1657 = vmatprep.subr.bf16.mxu0 %v1574
    %1658 = vmatpush2.bf16.msra.mxu0 %v1573
    %1659 = vmatprep.subr.bf16.mxu0 %v1570
    %1660 = vmatpush2.bf16.msra.mxu0 %v1569
    %1661 = vmatprep.subr.bf16.mxu0 %v1566
    %1662 = vmatpush2.bf16.msra.mxu0 %v1565
    %1663 = vmatprep.subr.bf16.mxu0 %v1562
    %1664 = vmatpush2.bf16.msra.mxu0 %v1561
    %1665 = vmatprep.subr.bf16.mxu0 %v1558
    %1666 = vmatpush2.bf16.msra.mxu0 %v1557
    %1667 = vmatprep.subr.bf16.mxu0 %v1554
    %1668 = vmatpush2.bf16.msra.mxu0 %v1553
    %1669 = vmatprep.subr.bf16.mxu0 %v1550
    %1670 = vmatpush2.bf16.msra.mxu0 %v1549
    %1671 = vmatprep.subr.bf16.mxu0 %v1546
    %1672 = vmatpush2.bf16.msra.mxu0 %v1545
    %1673 = vmatprep.mubr.bf16.mxu0 %v1255
    %1674 = vmatmul.mubr.bf16.gmra.mxu0 %v1254
    %v1675 = vpop.f32.mrf.mxu0
    %v1676 = vadd.f32 0.0, %v1675
    %v1677 = vpop.f32.mrf.mxu0
    %v1678 = vadd.f32 0.0, %v1677
    %v1679 = vpop.f32.mrf.mxu0
    %v1680 = vpop.f32.mrf.mxu0
    %1681 = vdwg.mxu0
    %1682 = vmatprep.subr.bf16.mxu0 %v1544
    %1683 = vmatpush1.bf16.msra.mxu0 %v1543
    %1684 = vmatprep.subr.bf16.mxu0 %v1540
    %1685 = vmatpush1.bf16.msra.mxu0 %v1539
    %1686 = vmatprep.subr.bf16.mxu0 %v1536
    %1687 = vmatpush1.bf16.msra.mxu0 %v1535
    %1688 = vmatprep.subr.bf16.mxu0 %v1532
    %1689 = vmatpush1.bf16.msra.mxu0 %v1531
    %1690 = vmatprep.subr.bf16.mxu0 %v1528
    %1691 = vmatpush1.bf16.msra.mxu0 %v1527
    %1692 = vmatprep.subr.bf16.mxu0 %v1524
    %1693 = vmatpush1.bf16.msra.mxu0 %v1523
    %1694 = vmatprep.subr.bf16.mxu0 %v1520
    %1695 = vmatpush1.bf16.msra.mxu0 %v1519
    %1696 = vmatprep.subr.bf16.mxu0 %v1516
    %1697 = vmatpush1.bf16.msra.mxu0 %v1515
    %1698 = vmatprep.subr.bf16.mxu0 %v1576
    %1699 = vmatpush2.bf16.msra.mxu0 %v1575
    %1700 = vmatprep.subr.bf16.mxu0 %v1572
    %1701 = vmatpush2.bf16.msra.mxu0 %v1571
    %1702 = vmatprep.subr.bf16.mxu0 %v1568
    %1703 = vmatpush2.bf16.msra.mxu0 %v1567
    %1704 = vmatprep.subr.bf16.mxu0 %v1564
    %1705 = vmatpush2.bf16.msra.mxu0 %v1563
    %1706 = vmatprep.subr.bf16.mxu0 %v1560
    %1707 = vmatpush2.bf16.msra.mxu0 %v1559
    %1708 = vmatprep.subr.bf16.mxu0 %v1556
    %1709 = vmatpush2.bf16.msra.mxu0 %v1555
    %1710 = vmatprep.subr.bf16.mxu0 %v1552
    %1711 = vmatpush2.bf16.msra.mxu0 %v1551
    %1712 = vmatprep.subr.bf16.mxu0 %v1548
    %1713 = vmatpush2.bf16.msra.mxu0 %v1547
    %1714 = vmatprep.mubr.bf16.mxu0 %v1255
    %1715 = vmatmul.mubr.bf16.gmra.mxu0 %v1254
    %v1716 = vpop.f32.mrf.mxu0
    %v1717 = vadd.f32 0.0, %v1716
    %v1718 = vpop.f32.mrf.mxu0
    %v1719 = vadd.f32 0.0, %v1718
    %v1720 = vpop.f32.mrf.mxu0
    %v1721 = vpop.f32.mrf.mxu0
    %1722 = vdwg.mxu0
    %v1723 = vmul.f32 %v1676, %v1717
    %v1724 = vmul.f32 %v1678, %v1719
    %v1725 = vpack.c.bf16 %v1723, %v1723
    %v1726 = vpack.c.bf16 %v1724, %v1724
    %v1727 = vld [vmem:[#allocation8] sm:$0xf]
    %v1728 = vld [vmem:[#allocation8 + $0x4] sm:$0xf]
    %v1729 = vld [vmem:[#allocation8 + $0x8] sm:$0xf]
    %v1730 = vld [vmem:[#allocation8 + $0xc] sm:$0xf]
    %v1731 = vld [vmem:[#allocation8 + $0x10] sm:$0xf]
    %v1732 = vld [vmem:[#allocation8 + $0x14] sm:$0xf]
    %v1733 = vld [vmem:[#allocation8 + $0x18] sm:$0xf]
    %v1734 = vld [vmem:[#allocation8 + $0x1c] sm:$0xf]
    %v1735 = vld [vmem:[#allocation8 + $0x20] sm:$0xf]
    %v1736 = vld [vmem:[#allocation8 + $0x24] sm:$0xf]
    %v1737 = vld [vmem:[#allocation8 + $0x28] sm:$0xf]
    %v1738 = vld [vmem:[#allocation8 + $0x2c] sm:$0xf]
    %v1739 = vld [vmem:[#allocation8 + $0x30] sm:$0xf]
    %v1740 = vld [vmem:[#allocation8 + $0x34] sm:$0xf]
    %v1741 = vld [vmem:[#allocation8 + $0x38] sm:$0xf]
    %v1742 = vld [vmem:[#allocation8 + $0x3c] sm:$0xf]
    %v1743 = vld [vmem:[#allocation8 + $0x40] sm:$0xf]
    %v1744 = vld [vmem:[#allocation8 + $0x44] sm:$0xf]
    %v1745 = vld [vmem:[#allocation8 + $0x48] sm:$0xf]
    %v1746 = vld [vmem:[#allocation8 + $0x4c] sm:$0xf]
    %v1747 = vld [vmem:[#allocation8 + $0x50] sm:$0xf]
    %v1748 = vld [vmem:[#allocation8 + $0x54] sm:$0xf]
    %v1749 = vld [vmem:[#allocation8 + $0x58] sm:$0xf]
    %v1750 = vld [vmem:[#allocation8 + $0x5c] sm:$0xf]
    %v1751 = vld [vmem:[#allocation8 + $0x60] sm:$0xf]
    %v1752 = vld [vmem:[#allocation8 + $0x64] sm:$0xf]
    %v1753 = vld [vmem:[#allocation8 + $0x68] sm:$0xf]
    %v1754 = vld [vmem:[#allocation8 + $0x6c] sm:$0xf]
    %v1755 = vld [vmem:[#allocation8 + $0x70] sm:$0xf]
    %v1756 = vld [vmem:[#allocation8 + $0x74] sm:$0xf]
    %v1757 = vld [vmem:[#allocation8 + $0x78] sm:$0xf]
    %v1758 = vld [vmem:[#allocation8 + $0x7c] sm:$0xf]
    %v1791 = vunpack.c.l.b16 %v1727
    %v1792 = vunpack.c.l.b16 %v1728
    %v1793 = vunpack.c.l.b16 %v1729
    %v1794 = vunpack.c.l.b16 %v1730
    %v1795 = vunpack.c.l.b16 %v1731
    %v1796 = vunpack.c.l.b16 %v1732
    %v1797 = vunpack.c.l.b16 %v1733
    %v1798 = vunpack.c.l.b16 %v1734
    %v1799 = vunpack.c.l.b16 %v1735
    %v1800 = vunpack.c.l.b16 %v1736
    %v1801 = vunpack.c.l.b16 %v1737
    %v1802 = vunpack.c.l.b16 %v1738
    %v1803 = vunpack.c.l.b16 %v1739
    %v1804 = vunpack.c.l.b16 %v1740
    %v1805 = vunpack.c.l.b16 %v1741
    %v1806 = vunpack.c.l.b16 %v1742
    %v1807 = vunpack.c.l.b16 %v1743
    %v1808 = vunpack.c.l.b16 %v1744
    %v1809 = vunpack.c.l.b16 %v1745
    %v1810 = vunpack.c.l.b16 %v1746
    %v1811 = vunpack.c.l.b16 %v1747
    %v1812 = vunpack.c.l.b16 %v1748
    %v1813 = vunpack.c.l.b16 %v1749
    %v1814 = vunpack.c.l.b16 %v1750
    %v1815 = vunpack.c.l.b16 %v1751
    %v1816 = vunpack.c.l.b16 %v1752
    %v1817 = vunpack.c.l.b16 %v1753
    %v1818 = vunpack.c.l.b16 %v1754
    %v1819 = vunpack.c.l.b16 %v1755
    %v1820 = vunpack.c.l.b16 %v1756
    %v1821 = vunpack.c.l.b16 %v1757
    %v1822 = vunpack.c.l.b16 %v1758
    %v1823 = vpack.c.b16 %v1792, %v1791
    %v1824 = vpack.c.b16 %v1794, %v1793
    %v1825 = vpack.c.b16 %v1796, %v1795
    %v1826 = vpack.c.b16 %v1798, %v1797
    %v1827 = vpack.c.b16 %v1800, %v1799
    %v1828 = vpack.c.b16 %v1802, %v1801
    %v1829 = vpack.c.b16 %v1804, %v1803
    %v1830 = vpack.c.b16 %v1806, %v1805
    %v1831 = vpack.c.b16 %v1808, %v1807
    %v1832 = vpack.c.b16 %v1810, %v1809
    %v1833 = vpack.c.b16 %v1812, %v1811
    %v1834 = vpack.c.b16 %v1814, %v1813
    %v1835 = vpack.c.b16 %v1816, %v1815
    %v1836 = vpack.c.b16 %v1818, %v1817
    %v1837 = vpack.c.b16 %v1820, %v1819
    %v1838 = vpack.c.b16 %v1822, %v1821
    %1855 = vmatprep.subr.bf16.mxu0 0
    %1856 = vmatpush1.bf16.msra.mxu0 %v1830
    %1857 = vmatprep.subr.bf16.mxu0 0
    %1858 = vmatpush1.bf16.msra.mxu0 %v1829
    %1859 = vmatprep.subr.bf16.mxu0 0
    %1860 = vmatpush1.bf16.msra.mxu0 %v1828
    %1861 = vmatprep.subr.bf16.mxu0 0
    %1862 = vmatpush1.bf16.msra.mxu0 %v1827
    %1863 = vmatprep.subr.bf16.mxu0 0
    %1864 = vmatpush1.bf16.msra.mxu0 %v1826
    %1865 = vmatprep.subr.bf16.mxu0 0
    %1866 = vmatpush1.bf16.msra.mxu0 %v1825
    %1867 = vmatprep.subr.bf16.mxu0 0
    %1868 = vmatpush1.bf16.msra.mxu0 %v1824
    %1869 = vmatprep.subr.bf16.mxu0 0
    %1870 = vmatpush1.bf16.msra.mxu0 %v1823
    %1871 = vmatprep.subr.bf16.mxu0 0
    %1872 = vmatpush2.bf16.msra.mxu0 %v1838
    %1873 = vmatprep.subr.bf16.mxu0 0
    %1874 = vmatpush2.bf16.msra.mxu0 %v1837
    %1875 = vmatprep.subr.bf16.mxu0 0
    %1876 = vmatpush2.bf16.msra.mxu0 %v1836
    %1877 = vmatprep.subr.bf16.mxu0 0
    %1878 = vmatpush2.bf16.msra.mxu0 %v1835
    %1879 = vmatprep.subr.bf16.mxu0 0
    %1880 = vmatpush2.bf16.msra.mxu0 %v1834
    %1881 = vmatprep.subr.bf16.mxu0 0
    %1882 = vmatpush2.bf16.msra.mxu0 %v1833
    %1883 = vmatprep.subr.bf16.mxu0 0
    %1884 = vmatpush2.bf16.msra.mxu0 %v1832
    %1885 = vmatprep.subr.bf16.mxu0 0
    %1886 = vmatpush2.bf16.msra.mxu0 %v1831
    %1887 = vmatprep.mubr.bf16.mxu0 %v1726
    %1888 = vmatmul.mubr.bf16.gmra.mxu0 %v1725
    %v1889 = vpop.f32.mrf.mxu0
    %v1890 = vadd.f32 0.0, %v1889
    %v1891 = vpop.f32.mrf.mxu0
    %v1892 = vpop.f32.mrf.mxu0
    %v1893 = vpop.f32.mrf.mxu0
    %1894 = vdwg.mxu0
    %1895 = vst [vmem:[#allocation10] sm:$0xff] %v1890
    // Predicated region
    $region34: #{tpu_custom_call.1} parent=1 // pred_check
      _
    $region35: #{tpu_custom_call.1} parent=1 // pred_check_branch
      %1897 = sbr.rel (0) target = $region37
    $region36: #{tpu_custom_call.1} parent=1 // pred_region
      %s1899 = ssub.s32 128, 128
      %1900 = vsyncadd [#allocation4], %s1899
      %s1902 = sshll.u32 [#allocation10], 4
      %s1903 = int_to_ptr.vmem [resolvable:$true] %s1902
      %1905 = dma.vmem_to_hbm [thread:$0]  %s1903, 128, %s4, [#allocation4]
    $region37: #{tpu_custom_call.1} parent=1 // pred_fallthru
      _
    // Predicated region
    $region38: #{tpu_custom_call.1} parent=1 // pred_check
      _
    $region39: #{tpu_custom_call.1} parent=1 // pred_check_branch
      %1907 = sbr.rel (0) target = $region41
    $region40: #{tpu_custom_call.1} parent=1 // pred_region
      %1908 = dma.done [#allocation4], 128
    $region41: #{tpu_custom_call.1} parent=1 // pred_fallthru
      _
    %1909 = vsyncpa [#allocation3], 1
    %1910 = vsyncpa [#allocation6], 1
    %1911 = vsyncpa [#allocation9], 1
    %1912 = vsyncpa [#allocation4], 1

</llo_original>
